<compile_context>
chip_gen: v7x
topology: tpu7x:2x2x1
jax: 0.10.0
libtpu: 0.0.40
codegen_flags: <defaults>
</compile_context>

<pallas_src>
import jax
import jax.numpy as jnp
from jax.experimental import pallas as pl
from jax.experimental.pallas import tpu as pltpu


def _mlp_kernel(x_ref, w_ref, b_ref, o_ref):
    """Fused L x (Linear + ReLU) on one batch tile.

    x_ref: (tile_b, D)   activations (f32 or bf16)
    w_ref: (L, D, D)     resident weight stack ([in, out] per layer)
    b_ref: (L, D)        resident bias stack (f32)
    o_ref: (tile_b, D)   output tile (original activation dtype)
    """
    h = x_ref[...]
    n_layers = w_ref.shape[0]
    for l in range(n_layers):  # static unroll; L is small
        # MXU matmul with f32 accumulation; matmul inputs in w_ref's dtype.
        z = jnp.dot(h.astype(w_ref.dtype), w_ref[l],
                    preferred_element_type=jnp.float32)
        # Bias + ReLU epilogue kept in f32 on the VPU (free alongside the MXU).
        h = jnp.maximum(z + b_ref[l:l + 1, :], 0.0)
    o_ref[...] = h.astype(o_ref.dtype)


def _round_up(v, m):
    return ((v + m - 1) // m) * m


def _pick_tile_b(B, sublane, cap=512):
    """Batch-tile heuristic.

    - As large as possible (per-grid-step overhead ~0.35 us; BlockSpec
      pipelines reach ~85% of roofline at 512-row tiles).
    - Keep >= 2 grid steps when the batch allows it so a v7x megacore
      (2 TensorCores, 'parallel' axis) is not left half idle.
    - Multiple of the sublane tile (8 for f32, 16 for bf16) whenever the tile
      is smaller than the full batch (the (8,128) BlockSpec rule).
    """
    if B <= cap:
        if B < 2 * sublane:
            return B                                   # single full-array block
        tile = _round_up((B + 1) // 2, sublane)        # >= 2 parallel steps
    else:
        tile = cap                                     # keeps VMEM/vreg pressure sane
    return min(tile, _round_up(B, sublane))


def dummy_model_forward(x, weights, biases, *, tile_b=None, compute_dtype=None):
    """Pallas forward pass of DummyModel(layers=L, dim=D).

    Args:
      x:        [B, D] activations.
      weights:  [L, D, D] stacked weights, stored [in, out].
      biases:   [L, D] stacked biases.
      tile_b:   batch tile (auto-picked if None).
      compute_dtype: optional matmul-input dtype (e.g. jnp.bfloat16 on v6e/v7x);
                accumulation and bias+ReLU stay in f32.
    """
    B, D = x.shape
    L = weights.shape[0]
    assert weights.shape == (L, D, D) and biases.shape == (L, D)

    out_dtype = x.dtype
    mat_dtype = compute_dtype if compute_dtype is not None else x.dtype

    xc = x.astype(mat_dtype)
    w = weights.astype(mat_dtype)          # halves weight DMA bytes in bf16 mode
    b = biases.astype(jnp.float32)         # epilogue always f32 (v5e-safe)

    sublane = 16 if mat_dtype == jnp.bfloat16 else 8
    if tile_b is None:
        tile_b = _pick_tile_b(B, sublane)
    grid = (pl.cdiv(B, tile_b),)           # masked tail block if B % tile_b != 0

    def build(single_buffer_resident):
        # Weights/biases have constant index maps -> block-resident.  Request
        # single-buffering for them so they don't hold 2x VMEM / extra copies.
        res_kw = (dict(pipeline_mode=pl.Buffered(1))
                  if single_buffer_resident else {})
        in_specs = [
            pl.BlockSpec((tile_b, D), lambda i: (i, 0)),             # x tile (pipelined)
            pl.BlockSpec((L, D, D), lambda i: (0, 0, 0), **res_kw),  # weight stack
            pl.BlockSpec((L, D), lambda i: (0, 0), **res_kw),        # bias stack
        ]
        return pl.pallas_call(
            _mlp_kernel,
            out_shape=jax.ShapeDtypeStruct((B, D), out_dtype),
            grid_spec=pltpu.PrefetchScalarGridSpec(
                num_scalar_prefetch=0,
                grid=grid,
                in_specs=in_specs,
                out_specs=pl.BlockSpec((tile_b, D), lambda i: (i, 0)),
            ),
            compiler_params=pltpu.CompilerParams(
                dimension_semantics=("parallel",),     # batch tiles are independent
                vmem_limit_bytes=32 * 1024 * 1024,     # explicit budget; <= physical on all gens
            ),
        )

    try:
        return build(single_buffer_resident=True)(xc, w, b)
    except Exception:
        # Fallback for jax versions without BlockSpec(pipeline_mode=pl.Buffered(1)):
        # default 2-deep buffers for the (tiny) resident operands.
        return build(single_buffer_resident=False)(xc, w, b)


def _reference(x, weights, biases):
    h = x
    for l in range(weights.shape[0]):
        h = jnp.maximum(h @ weights[l] + biases[l], 0.0)
    return h


if __name__ == "__main__":
    LAYERS, D, B = 2, 128, 256   # small shapes; D=128 keeps the lane axis full

    key = jax.random.PRNGKey(0)
    kx, kw, kb = jax.random.split(key, 3)

    scale = 1.0 / jnp.sqrt(jnp.float32(D))
    x = jax.random.normal(kx, (B, D), dtype=jnp.float32)
    weights = jax.random.uniform(kw, (LAYERS, D, D), jnp.float32, -scale, scale)
    biases = jax.random.uniform(kb, (LAYERS, D), jnp.float32, -scale, scale)

    ref = _reference(x, weights, biases)

    # f32 path (matches the torch module's numerics).
    out = jax.block_until_ready(dummy_model_forward(x, weights, biases))
    assert out.shape == (B, D)
    assert jnp.allclose(out, ref, atol=1e-5, rtol=1e-5), "f32 mismatch vs reference"

    # Ragged batch: exercises the cdiv grid + masked tail (no tiny-tile fallback).
    out_tail = jax.block_until_ready(dummy_model_forward(x[:200], weights, biases))
    assert jnp.allclose(out_tail, ref[:200], atol=1e-5, rtol=1e-5), "tail mismatch"

    # bf16 matmul inputs (v6e/v7x fast path); f32 accumulate + f32 epilogue.
    out_bf16 = jax.block_until_ready(
        dummy_model_forward(x, weights, biases, compute_dtype=jnp.bfloat16))
    assert jnp.allclose(out_bf16, ref, atol=8e-2, rtol=8e-2), "bf16 mismatch"

    print("KERNEL_OK")
</pallas_src>

<mosaic_0001>
module attributes {stable_mosaic.version = 11 : i64} {
  func.func @_mlp_kernel(%arg0: i32, %arg1: memref<128x128xf32, #tpu.memory_space<vmem>>, %arg2: memref<2x128x128xf32, #tpu.memory_space<vmem>>, %arg3: memref<2x128xf32, #tpu.memory_space<vmem>>, %arg4: memref<128x128xf32, #tpu.memory_space<vmem>>) attributes {dimension_semantics = [#tpu.dimension_semantics<parallel>], iteration_bounds = array<i64: 2>, scalar_prefetch = 0 : i64, scratch_operands = 0 : i64, tpu.core_type = #tpu.core_type<tc>, window_params = [{transform_indices = @transform_0, window_bounds = array<i64: 128, 128>}, {pipeline_mode = #tpu.pipeline_mode<synchronous>, transform_indices = @transform_1, window_bounds = array<i64: 2, 128, 128>}, {pipeline_mode = #tpu.pipeline_mode<synchronous>, transform_indices = @transform_2, window_bounds = array<i64: 2, 128>}, {transform_indices = @transform_3, window_bounds = array<i64: 128, 128>}]} {
    %c0 = arith.constant 0 : index
    %c0_0 = arith.constant 0 : index
    %0 = vector.load %arg1[%c0, %c0_0] : memref<128x128xf32, #tpu.memory_space<vmem>>, vector<128x128xf32>
    %c0_1 = arith.constant 0 : index
    %c0_2 = arith.constant 0 : index
    %c0_3 = arith.constant 0 : index
    %1 = vector.load %arg2[%c0_1, %c0_2, %c0_3] : memref<2x128x128xf32, #tpu.memory_space<vmem>>, vector<1x128x128xf32>
    %2 = vector.shape_cast %1 : vector<1x128x128xf32> to vector<128x128xf32>
    %cst = arith.constant dense<0.000000e+00> : vector<128x128xf32>
    %3 = tpu.matmul %0, %2, %cst {dimension_numbers = #tpu.dot_dimension_numbers<[1], [0], [0], [1], [0, 0, 1, 1], [], []>} : vector<128x128xf32>, vector<128x128xf32>, vector<128x128xf32> -> vector<128x128xf32>
    %c0_4 = arith.constant 0 : index
    %c0_5 = arith.constant 0 : index
    %4 = vector.load %arg3[%c0_4, %c0_5] : memref<2x128xf32, #tpu.memory_space<vmem>>, vector<1x128xf32>
    %5 = vector.broadcast %4 : vector<1x128xf32> to vector<128x128xf32>
    %6 = arith.addf %3, %5 : vector<128x128xf32>
    %cst_6 = arith.constant 0.000000e+00 : f32
    %7 = vector.broadcast %cst_6 : f32 to vector<128x128xf32>
    %8 = arith.maximumf %6, %7 : vector<128x128xf32>
    %c1 = arith.constant 1 : index
    %c0_7 = arith.constant 0 : index
    %c0_8 = arith.constant 0 : index
    %9 = vector.load %arg2[%c1, %c0_7, %c0_8] : memref<2x128x128xf32, #tpu.memory_space<vmem>>, vector<1x128x128xf32>
    %10 = vector.shape_cast %9 : vector<1x128x128xf32> to vector<128x128xf32>
    %cst_9 = arith.constant dense<0.000000e+00> : vector<128x128xf32>
    %11 = tpu.matmul %8, %10, %cst_9 {dimension_numbers = #tpu.dot_dimension_numbers<[1], [0], [0], [1], [0, 0, 1, 1], [], []>} : vector<128x128xf32>, vector<128x128xf32>, vector<128x128xf32> -> vector<128x128xf32>
    %c1_10 = arith.constant 1 : index
    %c0_11 = arith.constant 0 : index
    %12 = vector.load %arg3[%c1_10, %c0_11] : memref<2x128xf32, #tpu.memory_space<vmem>>, vector<1x128xf32>
    %13 = vector.broadcast %12 : vector<1x128xf32> to vector<128x128xf32>
    %14 = arith.addf %11, %13 : vector<128x128xf32>
    %cst_12 = arith.constant 0.000000e+00 : f32
    %15 = vector.broadcast %cst_12 : f32 to vector<128x128xf32>
    %16 = arith.maximumf %14, %15 : vector<128x128xf32>
    %c0_13 = arith.constant 0 : index
    %c0_14 = arith.constant 0 : index
    %17 = vector.load %arg4[%c0_13, %c0_14] : memref<128x128xf32, #tpu.memory_space<vmem>>, vector<128x128xf32>
    tpu.vector_store %arg4[%c0_13, %c0_14], %16 {strides = array<i32>} : memref<128x128xf32, #tpu.memory_space<vmem>>, vector<128x128xf32>,
    return
  }
  func.func @transform_0(%arg0: i32) -> (i32, i32) {
    %c0_i32 = arith.constant 0 : i32
    %c0_i32_0 = arith.constant 0 : i32
    return %arg0, %c0_i32 : i32, i32
  }
  func.func @transform_1(%arg0: i32) -> (i32, i32, i32) {
    %c0_i32 = arith.constant 0 : i32
    %c0_i32_0 = arith.constant 0 : i32
    %c0_i32_1 = arith.constant 0 : i32
    %c0_i32_2 = arith.constant 0 : i32
    return %c0_i32, %c0_i32_0, %c0_i32_1 : i32, i32, i32
  }
  func.func @transform_2(%arg0: i32) -> (i32, i32) {
    %c0_i32 = arith.constant 0 : i32
    %c0_i32_0 = arith.constant 0 : i32
    %c0_i32_1 = arith.constant 0 : i32
    return %c0_i32, %c0_i32_0 : i32, i32
  }
  func.func @transform_3(%arg0: i32) -> (i32, i32) {
    %c0_i32 = arith.constant 0 : i32
    %c0_i32_0 = arith.constant 0 : i32
    return %arg0, %c0_i32 : i32, i32
  }
}

module attributes {stable_mosaic.version = 11 : i64} {
  func.func @_mlp_kernel(%arg0: i32, %arg1: memref<128x128xf32, #tpu.memory_space<vmem>>, %arg2: memref<2x128x128xf32, #tpu.memory_space<vmem>>, %arg3: memref<2x128xf32, #tpu.memory_space<vmem>>, %arg4: memref<128x128xf32, #tpu.memory_space<vmem>>) attributes {dimension_semantics = [#tpu.dimension_semantics<parallel>], iteration_bounds = array<i64: 2>, scalar_prefetch = 0 : i64, scratch_operands = 0 : i64, tpu.core_type = #tpu.core_type<tc>, window_params = [{transform_indices = @transform_0, window_bounds = array<i64: 128, 128>}, {pipeline_mode = #tpu.pipeline_mode<synchronous>, transform_indices = @transform_1, window_bounds = array<i64: 2, 128, 128>}, {pipeline_mode = #tpu.pipeline_mode<synchronous>, transform_indices = @transform_2, window_bounds = array<i64: 2, 128>}, {transform_indices = @transform_3, window_bounds = array<i64: 128, 128>}]} {
    %c0 = arith.constant 0 : index
    %c0_0 = arith.constant 0 : index
    %0 = vector.load %arg1[%c0, %c0_0] : memref<128x128xf32, #tpu.memory_space<vmem>>, vector<128x128xf32>
    %c0_1 = arith.constant 0 : index
    %c0_2 = arith.constant 0 : index
    %c0_3 = arith.constant 0 : index
    %1 = vector.load %arg2[%c0_1, %c0_2, %c0_3] : memref<2x128x128xf32, #tpu.memory_space<vmem>>, vector<1x128x128xf32>
    %2 = vector.shape_cast %1 : vector<1x128x128xf32> to vector<128x128xf32>
    %cst = arith.constant dense<0.000000e+00> : vector<128x128xf32>
    %3 = tpu.matmul %0, %2, %cst {dimension_numbers = #tpu.dot_dimension_numbers<[1], [0], [0], [1], [0, 0, 1, 1], [], []>} : vector<128x128xf32>, vector<128x128xf32>, vector<128x128xf32> -> vector<128x128xf32>
    %c0_4 = arith.constant 0 : index
    %c0_5 = arith.constant 0 : index
    %4 = vector.load %arg3[%c0_4, %c0_5] : memref<2x128xf32, #tpu.memory_space<vmem>>, vector<1x128xf32>
    %5 = vector.broadcast %4 : vector<1x128xf32> to vector<128x128xf32>
    %6 = arith.addf %3, %5 : vector<128x128xf32>
    %cst_6 = arith.constant 0.000000e+00 : f32
    %7 = vector.broadcast %cst_6 : f32 to vector<128x128xf32>
    %8 = arith.maximumf %6, %7 : vector<128x128xf32>
    %c1 = arith.constant 1 : index
    %c0_7 = arith.constant 0 : index
    %c0_8 = arith.constant 0 : index
    %9 = vector.load %arg2[%c1, %c0_7, %c0_8] : memref<2x128x128xf32, #tpu.memory_space<vmem>>, vector<1x128x128xf32>
    %10 = vector.shape_cast %9 : vector<1x128x128xf32> to vector<128x128xf32>
    %cst_9 = arith.constant dense<0.000000e+00> : vector<128x128xf32>
    %11 = tpu.matmul %8, %10, %cst_9 {dimension_numbers = #tpu.dot_dimension_numbers<[1], [0], [0], [1], [0, 0, 1, 1], [], []>} : vector<128x128xf32>, vector<128x128xf32>, vector<128x128xf32> -> vector<128x128xf32>
    %c1_10 = arith.constant 1 : index
    %c0_11 = arith.constant 0 : index
    %12 = vector.load %arg3[%c1_10, %c0_11] : memref<2x128xf32, #tpu.memory_space<vmem>>, vector<1x128xf32>
    %13 = vector.broadcast %12 : vector<1x128xf32> to vector<128x128xf32>
    %14 = arith.addf %11, %13 : vector<128x128xf32>
    %cst_12 = arith.constant 0.000000e+00 : f32
    %15 = vector.broadcast %cst_12 : f32 to vector<128x128xf32>
    %16 = arith.maximumf %14, %15 : vector<128x128xf32>
    %c0_13 = arith.constant 0 : index
    %c0_14 = arith.constant 0 : index
    %17 = vector.load %arg4[%c0_13, %c0_14] : memref<128x128xf32, #tpu.memory_space<vmem>>, vector<128x128xf32>
    tpu.vector_store %arg4[%c0_13, %c0_14], %16 {strides = array<i32>} : memref<128x128xf32, #tpu.memory_space<vmem>>, vector<128x128xf32>,
    return
  }
  func.func @transform_0(%arg0: i32) -> (i32, i32) {
    %c0_i32 = arith.constant 0 : i32
    %c0_i32_0 = arith.constant 0 : i32
    return %arg0, %c0_i32 : i32, i32
  }
  func.func @transform_1(%arg0: i32) -> (i32, i32, i32) {
    %c0_i32 = arith.constant 0 : i32
    %c0_i32_0 = arith.constant 0 : i32
    %c0_i32_1 = arith.constant 0 : i32
    %c0_i32_2 = arith.constant 0 : i32
    return %c0_i32, %c0_i32_0, %c0_i32_1 : i32, i32, i32
  }
  func.func @transform_2(%arg0: i32) -> (i32, i32) {
    %c0_i32 = arith.constant 0 : i32
    %c0_i32_0 = arith.constant 0 : i32
    %c0_i32_1 = arith.constant 0 : i32
    return %c0_i32, %c0_i32_0 : i32, i32
  }
  func.func @transform_3(%arg0: i32) -> (i32, i32) {
    %c0_i32 = arith.constant 0 : i32
    %c0_i32_0 = arith.constant 0 : i32
    return %arg0, %c0_i32 : i32, i32
  }
}

</mosaic_0001>

<llo_original>
// kernel: tpu_custom_call.1
$region0: #{tpu_custom_call.1}
  #allocation0 [shape = 'u32[]', space=smem, size = 0x4, offset = 0x4, fixed_abs, tag = 'smem constant byte address 0x4 - core index']
  #allocation1 [shape = 'u32[144,128]{1,0:T(1,128)}', space=vmem, size = 0x12000, scoped, tag = 'internal scratch']
  %s0 = inlined_call_operand.hbm [shape: f32[256,128], index: 0, kind: input, shape index: {}]
  %s1 = inlined_call_operand.hbm [shape: f32[2,128,128], index: 1, kind: input, shape index: {}]
  %s2 = inlined_call_operand.vmem [shape: f32[2,128], index: 2, kind: input, shape index: {}]
  %s3 = inlined_call_operand.hbm [shape: f32[256,128], index: 3, kind: output, shape index: {}]
  %s4 = sld [smem:[#allocation0]]
  $region53: #{tpu_custom_call.1} parent=0
    _
  %s6 = ssub.s32 1, %s4
  %s7 = scalar_select 0, %s6, %s4
  $region1: #{tpu_custom_call.1} parent=0
    #allocation2 [shape = 'u8[131072]{0}', space=vmem, size = 0x20000, scoped, tag = 'input window, operand 0']
    #allocation3 [shape = 's32[2]{0}', space=sflag, size = 0x8, scoped, tag = 'scoped memory for tpu_custom_call.1']
    #allocation4 [shape = 's32[2]{0}', space=sflag, size = 0x8, scoped, tag = 'scoped memory for tpu_custom_call.1']
    #allocation5 [shape = 'u8[131072]{0}', space=vmem, size = 0x20000, scoped, tag = 'input window, operand 1, single buffered']
    #allocation6 [shape = 's32[1]{0}', space=sflag, size = 0x4, scoped, tag = 'scoped memory for tpu_custom_call.1']
    #allocation7 [shape = 'u8[131072]{0}', space=vmem, size = 0x20000, scoped, tag = 'output window, operand 0']
    %8 = vsyncpa [#allocation3], 0
    %s9 = scalar_lea.sflag [#allocation3], 1
    %10 = vsyncpa %s9, 0
    %11 = vsyncpa [#allocation6], 0
    %12 = vsyncpa [#allocation4], 0
    %s13 = scalar_lea.sflag [#allocation4], 1
    %14 = vsyncpa %s13, 0
    loop: start=0, step=1, limit=4
    $region2: #{tpu_custom_call.1} parent=1 // loop_pre_header
      _
    $region3: #{tpu_custom_call.1} parent=1 // loop_header
      %s16 = sphi 0, %s20
      %p17 = scmp.ge.s32.totalorder %s16, 4
      %s26 = sphi 0, %s28
      %s29 = sphi 0, %s26
      %s30 = sphi 0, %s29
      %s46 = sphi 0, %s30
      %s50 = sphi 0, %s50
      %s52 = sphi 0, %s50
      %s53 = sphi 0, %s52
      %s67 = sphi 0, %s53
      %s71 = sphi 0, %s71
      %s73 = sphi 0, %s71
      %s74 = sphi 0, %s73
      %s88 = sphi 0, %s74
      %s94 = sphi 0, %s96
      %s97 = sphi 0, %s94
      %s98 = sphi 0, %s97
      %s114 = sphi 0, %s98
    $region4: #{tpu_custom_call.1} parent=1 // loop_header_branch
      %19 = sbr.rel (%p17) target = $region8
    $region5: #{tpu_custom_call.1} parent=1 // loop_body
      %s21 = ssub.s32 %s16, 1
      %s22 = ssub.s32 %s16, 2
      %s23 = sadd.s32 %s16, 1
      %s24 = ssub.s32 %s16, %s23
      %p25 = scmp.eq.s32.totalorder %s24, 0
      %s27 = sadd.s32 %s26, 1
      %s28 = scalar_select %p25, %s26, %s27
      %p31 = pneg %p25
      %p32 = scmp.eq.s32.totalorder %s16, 1
      %p33 = por %p31, %p32
      %p34 = scmp.ne.s32.totalorder %s26, %s29
      %p35 = scmp.eq.s32.totalorder %s16, 0
      %p36 = por %p34, %p35
      %p37 = scmp.ne.s32.totalorder %s26, %s29
      %p38 = scmp.eq.s32.totalorder %s21, 1
      %p39 = por %p37, %p38
      %p40 = scmp.ne.s32.totalorder %s29, %s30
      %p41 = scmp.eq.s32.totalorder %s21, 0
      %p42 = por %p40, %p41
      %p43 = scmp.ne.s32.totalorder %s29, %s30
      %p44 = scmp.eq.s32.totalorder %s22, 1
      %p45 = por %p43, %p44
      %p47 = scmp.ne.s32.totalorder %s30, %s46
      %p48 = scmp.eq.s32.totalorder %s22, 0
      %p49 = por %p47, %p48
      %s51 = sadd.s32 %s50, 1
      %p54 = scmp.eq.s32.totalorder %s16, 1
      %p55 = scmp.ne.s32.totalorder %s50, %s52
      %p56 = scmp.eq.s32.totalorder %s16, 0
      %p57 = por %p55, %p56
      %p58 = scmp.ne.s32.totalorder %s50, %s52
      %p59 = scmp.eq.s32.totalorder %s21, 1
      %p60 = por %p58, %p59
      %p61 = scmp.ne.s32.totalorder %s52, %s53
      %p62 = scmp.eq.s32.totalorder %s21, 0
      %p63 = por %p61, %p62
      %p64 = scmp.ne.s32.totalorder %s52, %s53
      %p65 = scmp.eq.s32.totalorder %s22, 1
      %p66 = por %p64, %p65
      %p68 = scmp.ne.s32.totalorder %s53, %s67
      %p69 = scmp.eq.s32.totalorder %s22, 0
      %p70 = por %p68, %p69
      %s72 = sadd.s32 %s71, 1
      %p75 = scmp.eq.s32.totalorder %s16, 1
      %p76 = scmp.ne.s32.totalorder %s71, %s73
      %p77 = scmp.eq.s32.totalorder %s16, 0
      %p78 = por %p76, %p77
      %p79 = scmp.ne.s32.totalorder %s71, %s73
      %p80 = scmp.eq.s32.totalorder %s21, 1
      %p81 = por %p79, %p80
      %p82 = scmp.ne.s32.totalorder %s73, %s74
      %p83 = scmp.eq.s32.totalorder %s21, 0
      %p84 = por %p82, %p83
      %p85 = scmp.ne.s32.totalorder %s73, %s74
      %p86 = scmp.eq.s32.totalorder %s22, 1
      %p87 = por %p85, %p86
      %p89 = scmp.ne.s32.totalorder %s74, %s88
      %p90 = scmp.eq.s32.totalorder %s22, 0
      %p91 = por %p89, %p90
      %s92 = ssub.s32 %s16, %s23
      %p93 = scmp.eq.s32.totalorder %s92, 0
      %s95 = sadd.s32 %s94, 1
      %s96 = scalar_select %p93, %s94, %s95
      %p99 = pneg %p93
      %p100 = scmp.eq.s32.totalorder %s16, 1
      %p101 = por %p99, %p100
      %p102 = scmp.ne.s32.totalorder %s94, %s97
      %p103 = scmp.eq.s32.totalorder %s16, 0
      %p104 = por %p102, %p103
      %p105 = scmp.ne.s32.totalorder %s94, %s97
      %p106 = scmp.eq.s32.totalorder %s21, 1
      %p107 = por %p105, %p106
      %p108 = scmp.ne.s32.totalorder %s97, %s98
      %p109 = scmp.eq.s32.totalorder %s21, 0
      %p110 = por %p108, %p109
      %p111 = scmp.ne.s32.totalorder %s97, %s98
      %p112 = scmp.eq.s32.totalorder %s22, 1
      %p113 = por %p111, %p112
      %p115 = scmp.ne.s32.totalorder %s98, %s114
      %p116 = scmp.eq.s32.totalorder %s22, 0
      %p117 = por %p115, %p116
      %p118 = scmp.le.s32.totalorder 1, %s16
      %p119 = scmp.lt.s32.totalorder %s16, 3
      %p120 = pnand %p118, %p119
      %p121 = pneg %p120
      // Predicated region
      $region9: #{tpu_custom_call.1} parent=5 // pred_check
        _
      $region10: #{tpu_custom_call.1} parent=5 // pred_check_branch
        %123 = sbr.rel (%p120) target = $region12
      $region11: #{tpu_custom_call.1} parent=5 // pred_region
        %s124 = ssub.s32 %s16, 1
        // Predicated region
        $region13: #{tpu_custom_call.1} parent=11 // pred_check
          %p125 = pneg %p63
        $region14: #{tpu_custom_call.1} parent=11 // pred_check_branch
          %127 = sbr.rel (%p125) target = $region16
        $region15: #{tpu_custom_call.1} parent=11 // pred_region
          %s129 = ssub.s32 4096, 4096
          %130 = vsyncadd [#allocation6], %s129
          %s131 = sshll.u32 [#allocation5], 4
          %s132 = int_to_ptr.vmem [resolvable:$true] %s131
          %137 = dma.hbm_to_vmem [thread:$0]  %s1, 4096, %s132, [#allocation6], 128, 128, 8
        $region16: #{tpu_custom_call.1} parent=11 // pred_fallthru
          _
        // Predicated region
        $region17: #{tpu_custom_call.1} parent=11 // pred_check
          %p138 = pneg %p84
        $region18: #{tpu_custom_call.1} parent=11 // pred_check_branch
          %140 = sbr.rel (%p138) target = $region20
        $region19: #{tpu_custom_call.1} parent=11 // pred_region
          _
        $region20: #{tpu_custom_call.1} parent=11 // pred_fallthru
          _
      $region12: #{tpu_custom_call.1} parent=5 // pred_fallthru
        _
      %p141 = scmp.lt.s32.totalorder %s16, 2
      // Predicated region
      $region21: #{tpu_custom_call.1} parent=5 // pred_check
        %p142 = pneg %p141
      $region22: #{tpu_custom_call.1} parent=5 // pred_check_branch
        %144 = sbr.rel (%p142) target = $region24
      $region23: #{tpu_custom_call.1} parent=5 // pred_region
        // Predicated region
        $region25: #{tpu_custom_call.1} parent=23 // pred_check
          %p145 = pneg %p36
        $region26: #{tpu_custom_call.1} parent=23 // pred_check_branch
          %147 = sbr.rel (%p145) target = $region28
        $region27: #{tpu_custom_call.1} parent=23 // pred_region
          %s148 = sand.u32 %s26, 1
          %s149 = scalar_lea.sflag [#allocation3], %s148
          %s150 = sand.u32 %s26, 1
          %s151 = smul.addr %s150, 128
          %s152 = scalar_lea.vmem [#allocation2], %s151
          %s153 = smul.u32 16, %s16
          %s155 = ssub.s32 2048, 2048
          %156 = vsyncadd %s149, %s155
          %s157 = smul.addr %s153, 128
          %s158 = scalar_lea.hbm %s0, %s157
          %s159 = sshll.u32 %s152, 4
          %s160 = int_to_ptr.vmem [resolvable:$true] %s159
          %165 = dma.hbm_to_vmem [thread:$0]  %s158, 2048, %s160, %s149, 128, 128, 8
        $region28: #{tpu_custom_call.1} parent=23 // pred_fallthru
          _
      $region24: #{tpu_custom_call.1} parent=5 // pred_fallthru
        _
      %p166 = scmp.le.s32.totalorder 1, %s16
      %p167 = scmp.lt.s32.totalorder %s16, 3
      %p168 = pnand %p166, %p167
      %p169 = pneg %p168
      // Predicated region
      $region29: #{tpu_custom_call.1} parent=5 // pred_check
        _
      $region30: #{tpu_custom_call.1} parent=5 // pred_check_branch
        %171 = sbr.rel (%p168) target = $region32
      $region31: #{tpu_custom_call.1} parent=5 // pred_region
        %s172 = ssub.s32 %s16, 1
        %s173 = sand.u32 %s29, 1
        %s174 = scalar_lea.sflag [#allocation3], %s173
        %s175 = sand.u32 %s29, 1
        %s176 = smul.addr %s175, 128
        %s177 = scalar_lea.vmem [#allocation2], %s176
        // Predicated region
        $region33: #{tpu_custom_call.1} parent=31 // pred_check
          %p178 = pneg %p42
        $region34: #{tpu_custom_call.1} parent=31 // pred_check_branch
          %180 = sbr.rel (%p178) target = $region36
        $region35: #{tpu_custom_call.1} parent=31 // pred_region
          %181 = dma.done %s174, 2048
        $region36: #{tpu_custom_call.1} parent=31 // pred_fallthru
          _
        // Predicated region
        $region37: #{tpu_custom_call.1} parent=31 // pred_check
          %p182 = pneg %p63
        $region38: #{tpu_custom_call.1} parent=31 // pred_check_branch
          %184 = sbr.rel (%p182) target = $region40
        $region39: #{tpu_custom_call.1} parent=31 // pred_region
          %185 = dma.done [#allocation6], 4096
        $region40: #{tpu_custom_call.1} parent=31 // pred_fallthru
          _
        %s186 = sand.u32 %s29, 1
        %s187 = scalar_lea.sflag [#allocation3], %s186
        %s188 = sand.u32 %s29, 1
        %s189 = smul.addr %s188, 128
        %s190 = scalar_lea.vmem [#allocation2], %s189
        %p191 = pneg %p42
        %p192 = pneg %p39
        %p193 = pneg %p63
        %p194 = pneg %p60
        %p195 = pneg %p84
        %p196 = pneg %p81
        %p197 = pneg %p110
        %p198 = pneg %p107
        %s199 = sand.u32 %s97, 1
        %s200 = scalar_lea.sflag [#allocation4], %s199
        %s201 = sand.u32 %s97, 1
        %s202 = smul.addr %s201, 128
        %s203 = scalar_lea.vmem [#allocation7], %s202
        %s204 = smul.u32 16, %s21
        %s205 = smul.u32 16, %s21
        %v206 = vld [vmem:[%s177] sm:$0xff]
        %v207 = vld [vmem:[%s177 + $0x8] sm:$0xff]
        %v208 = vld [vmem:[%s177 + $0x10] sm:$0xff]
        %v209 = vld [vmem:[%s177 + $0x18] sm:$0xff]
        %v210 = vld [vmem:[%s177 + $0x20] sm:$0xff]
        %v211 = vld [vmem:[%s177 + $0x28] sm:$0xff]
        %v212 = vld [vmem:[%s177 + $0x30] sm:$0xff]
        %v213 = vld [vmem:[%s177 + $0x38] sm:$0xff]
        %v214 = vld [vmem:[%s177 + $0x40] sm:$0xff]
        %v215 = vld [vmem:[%s177 + $0x48] sm:$0xff]
        %v216 = vld [vmem:[%s177 + $0x50] sm:$0xff]
        %v217 = vld [vmem:[%s177 + $0x58] sm:$0xff]
        %v218 = vld [vmem:[%s177 + $0x60] sm:$0xff]
        %v219 = vld [vmem:[%s177 + $0x68] sm:$0xff]
        %v220 = vld [vmem:[%s177 + $0x70] sm:$0xff]
        %v221 = vld [vmem:[%s177 + $0x78] sm:$0xff]
        %v222 = vld [vmem:[#allocation5] sm:$0xff]
        %v223 = vld [vmem:[#allocation5 + $0x8] sm:$0xff]
        %v224 = vld [vmem:[#allocation5 + $0x10] sm:$0xff]
        %v225 = vld [vmem:[#allocation5 + $0x18] sm:$0xff]
        %v226 = vld [vmem:[#allocation5 + $0x20] sm:$0xff]
        %v227 = vld [vmem:[#allocation5 + $0x28] sm:$0xff]
        %v228 = vld [vmem:[#allocation5 + $0x30] sm:$0xff]
        %v229 = vld [vmem:[#allocation5 + $0x38] sm:$0xff]
        %v230 = vld [vmem:[#allocation5 + $0x40] sm:$0xff]
        %v231 = vld [vmem:[#allocation5 + $0x48] sm:$0xff]
        %v232 = vld [vmem:[#allocation5 + $0x50] sm:$0xff]
        %v233 = vld [vmem:[#allocation5 + $0x58] sm:$0xff]
        %v234 = vld [vmem:[#allocation5 + $0x60] sm:$0xff]
        %v235 = vld [vmem:[#allocation5 + $0x68] sm:$0xff]
        %v236 = vld [vmem:[#allocation5 + $0x70] sm:$0xff]
        %v237 = vld [vmem:[#allocation5 + $0x78] sm:$0xff]
        %v238 = vld [vmem:[%s2] sm:$0x1]
        %v239 = vlaneseq
        %v240 = vshrl.u32 %v239, 7
        %v241 = vsub.s32 0, %v240
        %v242 = vrot.slane %v238, %v241
        %243 = vmatprep.subr.mxu0 0.0
        %244 = vmatpush1.msra.mxu0 %v222
        %245 = vmatprep.subr.mxu0 0.0
        %246 = vmatpush1.msra.mxu0 %v223
        %247 = vmatprep.subr.mxu0 0.0
        %248 = vmatpush1.msra.mxu0 %v224
        %249 = vmatprep.subr.mxu0 0.0
        %250 = vmatpush1.msra.mxu0 %v225
        %251 = vmatprep.subr.mxu0 0.0
        %252 = vmatpush1.msra.mxu0 %v226
        %253 = vmatprep.subr.mxu0 0.0
        %254 = vmatpush1.msra.mxu0 %v227
        %255 = vmatprep.subr.mxu0 0.0
        %256 = vmatpush1.msra.mxu0 %v228
        %257 = vmatprep.subr.mxu0 0.0
        %258 = vmatpush1.msra.mxu0 %v229
        %259 = vmatprep.subr.mxu0 0.0
        %260 = vmatpush1.msra.mxu0 %v230
        %261 = vmatprep.subr.mxu0 0.0
        %262 = vmatpush1.msra.mxu0 %v231
        %263 = vmatprep.subr.mxu0 0.0
        %264 = vmatpush1.msra.mxu0 %v232
        %265 = vmatprep.subr.mxu0 0.0
        %266 = vmatpush1.msra.mxu0 %v233
        %267 = vmatprep.subr.mxu0 0.0
        %268 = vmatpush1.msra.mxu0 %v234
        %269 = vmatprep.subr.mxu0 0.0
        %270 = vmatpush1.msra.mxu0 %v235
        %271 = vmatprep.subr.mxu0 0.0
        %272 = vmatpush1.msra.mxu0 %v236
        %273 = vmatprep.subr.mxu0 0.0
        %274 = vmatpush1.msra.mxu0 %v237
        %275 = vmatprep.subr.mxu0 0.0
        %276 = vmatpush1.msra.mxu0 0.0
        %277 = vmatprep.subr.mxu0 0.0
        %278 = vmatpush1.msra.mxu0 0.0
        %279 = vmatprep.subr.mxu0 0.0
        %280 = vmatpush1.msra.mxu0 0.0
        %281 = vmatprep.subr.mxu0 0.0
        %282 = vmatpush1.msra.mxu0 0.0
        %283 = vmatprep.subr.mxu0 0.0
        %284 = vmatpush1.msra.mxu0 0.0
        %285 = vmatprep.subr.mxu0 0.0
        %286 = vmatpush1.msra.mxu0 0.0
        %287 = vmatprep.subr.mxu0 0.0
        %288 = vmatpush1.msra.mxu0 0.0
        %289 = vmatprep.subr.mxu0 0.0
        %290 = vmatpush1.msra.mxu0 0.0
        %291 = vmatprep.subr.mxu0 0.0
        %292 = vmatpush1.msra.mxu0 0.0
        %293 = vmatprep.subr.mxu0 0.0
        %294 = vmatpush1.msra.mxu0 0.0
        %295 = vmatprep.subr.mxu0 0.0
        %296 = vmatpush1.msra.mxu0 0.0
        %297 = vmatprep.subr.mxu0 0.0
        %298 = vmatpush1.msra.mxu0 0.0
        %299 = vmatprep.subr.mxu0 0.0
        %300 = vmatpush1.msra.mxu0 0.0
        %301 = vmatprep.subr.mxu0 0.0
        %302 = vmatpush1.msra.mxu0 0.0
        %303 = vmatprep.subr.mxu0 0.0
        %304 = vmatpush1.msra.mxu0 0.0
        %305 = vmatprep.subr.mxu0 0.0
        %306 = vmatpush1.msra.mxu0 0.0
        %307 = vmatprep.mubr.f32.mxu0 0.0
        %308 = vmatmul.mubr.f32.gmra.mrb[0].mxu0 %v206
        %v309 = vpop.f32.mrb[0].mxu0
        %v310 = vadd.f32 %v242, %v309
        %v311 = vpop.f32.mrb[0].mxu0
        %312 = vmatprep.mubr.f32.mxu0 0.0
        %313 = vmatmul.mubr.f32.gmra.mrb[0].mxu0 %v207
        %v314 = vpop.f32.mrb[0].mxu0
        %v315 = vadd.f32 %v242, %v314
        %v316 = vpop.f32.mrb[0].mxu0
        %317 = vmatprep.mubr.f32.mxu0 0.0
        %318 = vmatmul.mubr.f32.gmra.mrb[0].mxu0 %v208
        %v319 = vpop.f32.mrb[0].mxu0
        %v320 = vadd.f32 %v242, %v319
        %v321 = vpop.f32.mrb[0].mxu0
        %322 = vmatprep.mubr.f32.mxu0 0.0
        %323 = vmatmul.mubr.f32.gmra.mrb[0].mxu0 %v209
        %v324 = vpop.f32.mrb[0].mxu0
        %v325 = vadd.f32 %v242, %v324
        %v326 = vpop.f32.mrb[0].mxu0
        %327 = vmatprep.mubr.f32.mxu0 0.0
        %328 = vmatmul.mubr.f32.gmra.mrb[0].mxu0 %v210
        %v329 = vpop.f32.mrb[0].mxu0
        %v330 = vadd.f32 %v242, %v329
        %v331 = vpop.f32.mrb[0].mxu0
        %332 = vmatprep.mubr.f32.mxu0 0.0
        %333 = vmatmul.mubr.f32.gmra.mrb[0].mxu0 %v211
        %v334 = vpop.f32.mrb[0].mxu0
        %v335 = vadd.f32 %v242, %v334
        %v336 = vpop.f32.mrb[0].mxu0
        %337 = vmatprep.mubr.f32.mxu0 0.0
        %338 = vmatmul.mubr.f32.gmra.mrb[0].mxu0 %v212
        %v339 = vpop.f32.mrb[0].mxu0
        %v340 = vadd.f32 %v242, %v339
        %v341 = vpop.f32.mrb[0].mxu0
        %342 = vmatprep.mubr.f32.mxu0 0.0
        %343 = vmatmul.mubr.f32.gmra.mrb[0].mxu0 %v213
        %v344 = vpop.f32.mrb[0].mxu0
        %v345 = vadd.f32 %v242, %v344
        %v346 = vpop.f32.mrb[0].mxu0
        %347 = vmatprep.mubr.f32.mxu0 0.0
        %348 = vmatmul.mubr.f32.gmra.mrb[0].mxu0 %v214
        %v349 = vpop.f32.mrb[0].mxu0
        %v350 = vadd.f32 %v242, %v349
        %v351 = vpop.f32.mrb[0].mxu0
        %352 = vmatprep.mubr.f32.mxu0 0.0
        %353 = vmatmul.mubr.f32.gmra.mrb[0].mxu0 %v215
        %v354 = vpop.f32.mrb[0].mxu0
        %v355 = vadd.f32 %v242, %v354
        %v356 = vpop.f32.mrb[0].mxu0
        %357 = vmatprep.mubr.f32.mxu0 0.0
        %358 = vmatmul.mubr.f32.gmra.mrb[0].mxu0 %v216
        %v359 = vpop.f32.mrb[0].mxu0
        %v360 = vadd.f32 %v242, %v359
        %v361 = vpop.f32.mrb[0].mxu0
        %362 = vmatprep.mubr.f32.mxu0 0.0
        %363 = vmatmul.mubr.f32.gmra.mrb[0].mxu0 %v217
        %v364 = vpop.f32.mrb[0].mxu0
        %v365 = vadd.f32 %v242, %v364
        %v366 = vpop.f32.mrb[0].mxu0
        %367 = vmatprep.mubr.f32.mxu0 0.0
        %368 = vmatmul.mubr.f32.gmra.mrb[0].mxu0 %v218
        %v369 = vpop.f32.mrb[0].mxu0
        %v370 = vadd.f32 %v242, %v369
        %v371 = vpop.f32.mrb[0].mxu0
        %372 = vmatprep.mubr.f32.mxu0 0.0
        %373 = vmatmul.mubr.f32.gmra.mrb[0].mxu0 %v219
        %v374 = vpop.f32.mrb[0].mxu0
        %v375 = vadd.f32 %v242, %v374
        %v376 = vpop.f32.mrb[0].mxu0
        %377 = vmatprep.mubr.f32.mxu0 0.0
        %378 = vmatmul.mubr.f32.gmra.mrb[0].mxu0 %v220
        %v379 = vpop.f32.mrb[0].mxu0
        %v380 = vadd.f32 %v242, %v379
        %v381 = vpop.f32.mrb[0].mxu0
        %382 = vmatprep.mubr.f32.mxu0 0.0
        %383 = vmatmul.mubr.f32.gmra.mrb[0].mxu0 %v221
        %v384 = vpop.f32.mrb[0].mxu0
        %v385 = vadd.f32 %v242, %v384
        %v386 = vpop.f32.mrb[0].mxu0
        %387 = vdwg.mxu0
        %v388 = vmax.f32 %v310, 0.0
        %v389 = vmax.f32 %v315, 0.0
        %v390 = vmax.f32 %v320, 0.0
        %v391 = vmax.f32 %v325, 0.0
        %v392 = vmax.f32 %v330, 0.0
        %v393 = vmax.f32 %v335, 0.0
        %v394 = vmax.f32 %v340, 0.0
        %v395 = vmax.f32 %v345, 0.0
        %v396 = vmax.f32 %v350, 0.0
        %v397 = vmax.f32 %v355, 0.0
        %v398 = vmax.f32 %v360, 0.0
        %v399 = vmax.f32 %v365, 0.0
        %v400 = vmax.f32 %v370, 0.0
        %v401 = vmax.f32 %v375, 0.0
        %v402 = vmax.f32 %v380, 0.0
        %v403 = vmax.f32 %v385, 0.0
        %s404 = scalar_lea.vmem [#allocation5], 128
        %v405 = vld [vmem:[%s404] sm:$0xff]
        %v406 = vld [vmem:[%s404 + $0x8] sm:$0xff]
        %v407 = vld [vmem:[%s404 + $0x10] sm:$0xff]
        %v408 = vld [vmem:[%s404 + $0x18] sm:$0xff]
        %v409 = vld [vmem:[%s404 + $0x20] sm:$0xff]
        %v410 = vld [vmem:[%s404 + $0x28] sm:$0xff]
        %v411 = vld [vmem:[%s404 + $0x30] sm:$0xff]
        %v412 = vld [vmem:[%s404 + $0x38] sm:$0xff]
        %v413 = vld [vmem:[%s404 + $0x40] sm:$0xff]
        %v414 = vld [vmem:[%s404 + $0x48] sm:$0xff]
        %v415 = vld [vmem:[%s404 + $0x50] sm:$0xff]
        %v416 = vld [vmem:[%s404 + $0x58] sm:$0xff]
        %v417 = vld [vmem:[%s404 + $0x60] sm:$0xff]
        %v418 = vld [vmem:[%s404 + $0x68] sm:$0xff]
        %v419 = vld [vmem:[%s404 + $0x70] sm:$0xff]
        %v420 = vld [vmem:[%s404 + $0x78] sm:$0xff]
        %v421 = vld [vmem:[%s2 + $0x1] sm:$0x1]
        %v422 = vlaneseq
        %v423 = vshrl.u32 %v422, 7
        %v424 = vsub.s32 0, %v423
        %v425 = vrot.slane %v421, %v424
        %426 = vmatprep.subr.mxu0 0.0
        %427 = vmatpush1.msra.mxu0 %v405
        %428 = vmatprep.subr.mxu0 0.0
        %429 = vmatpush1.msra.mxu0 %v406
        %430 = vmatprep.subr.mxu0 0.0
        %431 = vmatpush1.msra.mxu0 %v407
        %432 = vmatprep.subr.mxu0 0.0
        %433 = vmatpush1.msra.mxu0 %v408
        %434 = vmatprep.subr.mxu0 0.0
        %435 = vmatpush1.msra.mxu0 %v409
        %436 = vmatprep.subr.mxu0 0.0
        %437 = vmatpush1.msra.mxu0 %v410
        %438 = vmatprep.subr.mxu0 0.0
        %439 = vmatpush1.msra.mxu0 %v411
        %440 = vmatprep.subr.mxu0 0.0
        %441 = vmatpush1.msra.mxu0 %v412
        %442 = vmatprep.subr.mxu0 0.0
        %443 = vmatpush1.msra.mxu0 %v413
        %444 = vmatprep.subr.mxu0 0.0
        %445 = vmatpush1.msra.mxu0 %v414
        %446 = vmatprep.subr.mxu0 0.0
        %447 = vmatpush1.msra.mxu0 %v415
        %448 = vmatprep.subr.mxu0 0.0
        %449 = vmatpush1.msra.mxu0 %v416
        %450 = vmatprep.subr.mxu0 0.0
        %451 = vmatpush1.msra.mxu0 %v417
        %452 = vmatprep.subr.mxu0 0.0
        %453 = vmatpush1.msra.mxu0 %v418
        %454 = vmatprep.subr.mxu0 0.0
        %455 = vmatpush1.msra.mxu0 %v419
        %456 = vmatprep.subr.mxu0 0.0
        %457 = vmatpush1.msra.mxu0 %v420
        %458 = vmatprep.subr.mxu0 0.0
        %459 = vmatpush1.msra.mxu0 0.0
        %460 = vmatprep.subr.mxu0 0.0
        %461 = vmatpush1.msra.mxu0 0.0
        %462 = vmatprep.subr.mxu0 0.0
        %463 = vmatpush1.msra.mxu0 0.0
        %464 = vmatprep.subr.mxu0 0.0
        %465 = vmatpush1.msra.mxu0 0.0
        %466 = vmatprep.subr.mxu0 0.0
        %467 = vmatpush1.msra.mxu0 0.0
        %468 = vmatprep.subr.mxu0 0.0
        %469 = vmatpush1.msra.mxu0 0.0
        %470 = vmatprep.subr.mxu0 0.0
        %471 = vmatpush1.msra.mxu0 0.0
        %472 = vmatprep.subr.mxu0 0.0
        %473 = vmatpush1.msra.mxu0 0.0
        %474 = vmatprep.subr.mxu0 0.0
        %475 = vmatpush1.msra.mxu0 0.0
        %476 = vmatprep.subr.mxu0 0.0
        %477 = vmatpush1.msra.mxu0 0.0
        %478 = vmatprep.subr.mxu0 0.0
        %479 = vmatpush1.msra.mxu0 0.0
        %480 = vmatprep.subr.mxu0 0.0
        %481 = vmatpush1.msra.mxu0 0.0
        %482 = vmatprep.subr.mxu0 0.0
        %483 = vmatpush1.msra.mxu0 0.0
        %484 = vmatprep.subr.mxu0 0.0
        %485 = vmatpush1.msra.mxu0 0.0
        %486 = vmatprep.subr.mxu0 0.0
        %487 = vmatpush1.msra.mxu0 0.0
        %488 = vmatprep.subr.mxu0 0.0
        %489 = vmatpush1.msra.mxu0 0.0
        %490 = vmatprep.mubr.f32.mxu0 0.0
        %491 = vmatmul.mubr.f32.gmra.mrb[0].mxu0 %v388
        %v492 = vpop.f32.mrb[0].mxu0
        %v493 = vadd.f32 %v425, %v492
        %v494 = vpop.f32.mrb[0].mxu0
        %495 = vmatprep.mubr.f32.mxu0 0.0
        %496 = vmatmul.mubr.f32.gmra.mrb[0].mxu0 %v389
        %v497 = vpop.f32.mrb[0].mxu0
        %v498 = vadd.f32 %v425, %v497
        %v499 = vpop.f32.mrb[0].mxu0
        %500 = vmatprep.mubr.f32.mxu0 0.0
        %501 = vmatmul.mubr.f32.gmra.mrb[0].mxu0 %v390
        %v502 = vpop.f32.mrb[0].mxu0
        %v503 = vadd.f32 %v425, %v502
        %v504 = vpop.f32.mrb[0].mxu0
        %505 = vmatprep.mubr.f32.mxu0 0.0
        %506 = vmatmul.mubr.f32.gmra.mrb[0].mxu0 %v391
        %v507 = vpop.f32.mrb[0].mxu0
        %v508 = vadd.f32 %v425, %v507
        %v509 = vpop.f32.mrb[0].mxu0
        %510 = vmatprep.mubr.f32.mxu0 0.0
        %511 = vmatmul.mubr.f32.gmra.mrb[0].mxu0 %v392
        %v512 = vpop.f32.mrb[0].mxu0
        %v513 = vadd.f32 %v425, %v512
        %v514 = vpop.f32.mrb[0].mxu0
        %515 = vmatprep.mubr.f32.mxu0 0.0
        %516 = vmatmul.mubr.f32.gmra.mrb[0].mxu0 %v393
        %v517 = vpop.f32.mrb[0].mxu0
        %v518 = vadd.f32 %v425, %v517
        %v519 = vpop.f32.mrb[0].mxu0
        %520 = vmatprep.mubr.f32.mxu0 0.0
        %521 = vmatmul.mubr.f32.gmra.mrb[0].mxu0 %v394
        %v522 = vpop.f32.mrb[0].mxu0
        %v523 = vadd.f32 %v425, %v522
        %v524 = vpop.f32.mrb[0].mxu0
        %525 = vmatprep.mubr.f32.mxu0 0.0
        %526 = vmatmul.mubr.f32.gmra.mrb[0].mxu0 %v395
        %v527 = vpop.f32.mrb[0].mxu0
        %v528 = vadd.f32 %v425, %v527
        %v529 = vpop.f32.mrb[0].mxu0
        %530 = vmatprep.mubr.f32.mxu0 0.0
        %531 = vmatmul.mubr.f32.gmra.mrb[0].mxu0 %v396
        %v532 = vpop.f32.mrb[0].mxu0
        %v533 = vadd.f32 %v425, %v532
        %v534 = vpop.f32.mrb[0].mxu0
        %535 = vmatprep.mubr.f32.mxu0 0.0
        %536 = vmatmul.mubr.f32.gmra.mrb[0].mxu0 %v397
        %v537 = vpop.f32.mrb[0].mxu0
        %v538 = vadd.f32 %v425, %v537
        %v539 = vpop.f32.mrb[0].mxu0
        %540 = vmatprep.mubr.f32.mxu0 0.0
        %541 = vmatmul.mubr.f32.gmra.mrb[0].mxu0 %v398
        %v542 = vpop.f32.mrb[0].mxu0
        %v543 = vadd.f32 %v425, %v542
        %v544 = vpop.f32.mrb[0].mxu0
        %545 = vmatprep.mubr.f32.mxu0 0.0
        %546 = vmatmul.mubr.f32.gmra.mrb[0].mxu0 %v399
        %v547 = vpop.f32.mrb[0].mxu0
        %v548 = vadd.f32 %v425, %v547
        %v549 = vpop.f32.mrb[0].mxu0
        %550 = vmatprep.mubr.f32.mxu0 0.0
        %551 = vmatmul.mubr.f32.gmra.mrb[0].mxu0 %v400
        %v552 = vpop.f32.mrb[0].mxu0
        %v553 = vadd.f32 %v425, %v552
        %v554 = vpop.f32.mrb[0].mxu0
        %555 = vmatprep.mubr.f32.mxu0 0.0
        %556 = vmatmul.mubr.f32.gmra.mrb[0].mxu0 %v401
        %v557 = vpop.f32.mrb[0].mxu0
        %v558 = vadd.f32 %v425, %v557
        %v559 = vpop.f32.mrb[0].mxu0
        %560 = vmatprep.mubr.f32.mxu0 0.0
        %561 = vmatmul.mubr.f32.gmra.mrb[0].mxu0 %v402
        %v562 = vpop.f32.mrb[0].mxu0
        %v563 = vadd.f32 %v425, %v562
        %v564 = vpop.f32.mrb[0].mxu0
        %565 = vmatprep.mubr.f32.mxu0 0.0
        %566 = vmatmul.mubr.f32.gmra.mrb[0].mxu0 %v403
        %v567 = vpop.f32.mrb[0].mxu0
        %v568 = vadd.f32 %v425, %v567
        %v569 = vpop.f32.mrb[0].mxu0
        %570 = vdwg.mxu0
        %v571 = vmax.f32 %v493, 0.0
        %v572 = vmax.f32 %v498, 0.0
        %v573 = vmax.f32 %v503, 0.0
        %v574 = vmax.f32 %v508, 0.0
        %v575 = vmax.f32 %v513, 0.0
        %v576 = vmax.f32 %v518, 0.0
        %v577 = vmax.f32 %v523, 0.0
        %v578 = vmax.f32 %v528, 0.0
        %v579 = vmax.f32 %v533, 0.0
        %v580 = vmax.f32 %v538, 0.0
        %v581 = vmax.f32 %v543, 0.0
        %v582 = vmax.f32 %v548, 0.0
        %v583 = vmax.f32 %v553, 0.0
        %v584 = vmax.f32 %v558, 0.0
        %v585 = vmax.f32 %v563, 0.0
        %v586 = vmax.f32 %v568, 0.0
        %587 = vst [vmem:[%s203] sm:$0xff] %v571
        %588 = vst [vmem:[%s203 + $0x8] sm:$0xff] %v572
        %589 = vst [vmem:[%s203 + $0x10] sm:$0xff] %v573
        %590 = vst [vmem:[%s203 + $0x18] sm:$0xff] %v574
        %591 = vst [vmem:[%s203 + $0x20] sm:$0xff] %v575
        %592 = vst [vmem:[%s203 + $0x28] sm:$0xff] %v576
        %593 = vst [vmem:[%s203 + $0x30] sm:$0xff] %v577
        %594 = vst [vmem:[%s203 + $0x38] sm:$0xff] %v578
        %595 = vst [vmem:[%s203 + $0x40] sm:$0xff] %v579
        %596 = vst [vmem:[%s203 + $0x48] sm:$0xff] %v580
        %597 = vst [vmem:[%s203 + $0x50] sm:$0xff] %v581
        %598 = vst [vmem:[%s203 + $0x58] sm:$0xff] %v582
        %599 = vst [vmem:[%s203 + $0x60] sm:$0xff] %v583
        %600 = vst [vmem:[%s203 + $0x68] sm:$0xff] %v584
        %601 = vst [vmem:[%s203 + $0x70] sm:$0xff] %v585
        %602 = vst [vmem:[%s203 + $0x78] sm:$0xff] %v586
        %s603 = sand.u32 %s97, 1
        %s604 = scalar_lea.sflag [#allocation4], %s603
        %s605 = sand.u32 %s97, 1
        %s606 = smul.addr %s605, 128
        %s607 = scalar_lea.vmem [#allocation7], %s606
        // Predicated region
        $region41: #{tpu_custom_call.1} parent=31 // pred_check
          %p608 = pneg %p107
        $region42: #{tpu_custom_call.1} parent=31 // pred_check_branch
          %610 = sbr.rel (%p608) target = $region44
        $region43: #{tpu_custom_call.1} parent=31 // pred_region
          %s611 = smul.u32 16, %s21
          %s613 = ssub.s32 2048, 2048
          %614 = vsyncadd %s604, %s613
          %s615 = smul.addr %s611, 128
          %s616 = scalar_lea.hbm %s3, %s615
          %s617 = sshll.u32 %s607, 4
          %s618 = int_to_ptr.vmem [resolvable:$true] %s617
          %623 = dma.vmem_to_hbm [thread:$0]  %s618, 2048, %s616, %s604, 128, 128, 8
        $region44: #{tpu_custom_call.1} parent=31 // pred_fallthru
          _
      $region32: #{tpu_custom_call.1} parent=5 // pred_fallthru
        _
      %p624 = scmp.le.s32.totalorder 2, %s16
      // Predicated region
      $region45: #{tpu_custom_call.1} parent=5 // pred_check
        %p625 = pneg %p624
      $region46: #{tpu_custom_call.1} parent=5 // pred_check_branch
        %627 = sbr.rel (%p625) target = $region48
      $region47: #{tpu_custom_call.1} parent=5 // pred_region
        %s628 = ssub.s32 %s16, 2
        // Predicated region
        $region49: #{tpu_custom_call.1} parent=47 // pred_check
          %p629 = pneg %p113
        $region50: #{tpu_custom_call.1} parent=47 // pred_check_branch
          %631 = sbr.rel (%p629) target = $region52
        $region51: #{tpu_custom_call.1} parent=47 // pred_region
          %s632 = sand.u32 %s98, 1
          %s633 = scalar_lea.sflag [#allocation4], %s632
          %s634 = sand.u32 %s98, 1
          %s635 = smul.addr %s634, 128
          %s636 = scalar_lea.vmem [#allocation7], %s635
          %637 = dma.done %s633, 2048
        $region52: #{tpu_custom_call.1} parent=47 // pred_fallthru
          _
      $region48: #{tpu_custom_call.1} parent=5 // pred_fallthru
        _
    $region6: #{tpu_custom_call.1} parent=1 // loop_footer
      %s20 = sadd.s32 1, %s16
    $region7: #{tpu_custom_call.1} parent=1 // loop_footer_branch
      %15 = sbr.rel target = $region3
    $region8: #{tpu_custom_call.1} parent=1 // loop_exit
      _
    %638 = vsyncpa [#allocation3], 1
    %s639 = scalar_lea.sflag [#allocation3], 1
    %640 = vsyncpa %s639, 1
    %641 = vsyncpa [#allocation6], 1
    %642 = vsyncpa [#allocation4], 1
    %s643 = scalar_lea.sflag [#allocation4], 1
    %644 = vsyncpa %s643, 1

// kernel: tpu_custom_call.1
$region0: #{tpu_custom_call.1}
  #allocation0 [shape = 'u32[]', space=smem, size = 0x4, offset = 0x4, fixed_abs, tag = 'smem constant byte address 0x4 - core index']
  #allocation1 [shape = 'u32[144,128]{1,0:T(1,128)}', space=vmem, size = 0x12000, scoped, tag = 'internal scratch']
  %s0 = inlined_call_operand.hbm [shape: f32[256,128], index: 0, kind: input, shape index: {}]
  %s1 = inlined_call_operand.hbm [shape: f32[2,128,128], index: 1, kind: input, shape index: {}]
  %s2 = inlined_call_operand.vmem [shape: f32[2,128], index: 2, kind: input, shape index: {}]
  %s3 = inlined_call_operand.hbm [shape: f32[256,128], index: 3, kind: output, shape index: {}]
  %s4 = sld [smem:[#allocation0]]
  $region53: #{tpu_custom_call.1} parent=0
    _
  %s6 = ssub.s32 1, %s4
  %s7 = scalar_select 0, %s6, %s4
  $region1: #{tpu_custom_call.1} parent=0
    #allocation2 [shape = 'u8[131072]{0}', space=vmem, size = 0x20000, scoped, tag = 'input window, operand 0']
    #allocation3 [shape = 's32[2]{0}', space=sflag, size = 0x8, scoped, tag = 'scoped memory for tpu_custom_call.1']
    #allocation4 [shape = 's32[2]{0}', space=sflag, size = 0x8, scoped, tag = 'scoped memory for tpu_custom_call.1']
    #allocation5 [shape = 'u8[131072]{0}', space=vmem, size = 0x20000, scoped, tag = 'input window, operand 1, single buffered']
    #allocation6 [shape = 's32[1]{0}', space=sflag, size = 0x4, scoped, tag = 'scoped memory for tpu_custom_call.1']
    #allocation7 [shape = 'u8[131072]{0}', space=vmem, size = 0x20000, scoped, tag = 'output window, operand 0']
    %8 = vsyncpa [#allocation3], 0
    %s9 = scalar_lea.sflag [#allocation3], 1
    %10 = vsyncpa %s9, 0
    %11 = vsyncpa [#allocation6], 0
    %12 = vsyncpa [#allocation4], 0
    %s13 = scalar_lea.sflag [#allocation4], 1
    %14 = vsyncpa %s13, 0
    loop: start=0, step=1, limit=4
    $region2: #{tpu_custom_call.1} parent=1 // loop_pre_header
      _
    $region3: #{tpu_custom_call.1} parent=1 // loop_header
      %s16 = sphi 0, %s20
      %p17 = scmp.ge.s32.totalorder %s16, 4
      %s26 = sphi 0, %s28
      %s29 = sphi 0, %s26
      %s30 = sphi 0, %s29
      %s46 = sphi 0, %s30
      %s50 = sphi 0, %s50
      %s52 = sphi 0, %s50
      %s53 = sphi 0, %s52
      %s67 = sphi 0, %s53
      %s71 = sphi 0, %s71
      %s73 = sphi 0, %s71
      %s74 = sphi 0, %s73
      %s88 = sphi 0, %s74
      %s94 = sphi 0, %s96
      %s97 = sphi 0, %s94
      %s98 = sphi 0, %s97
      %s114 = sphi 0, %s98
    $region4: #{tpu_custom_call.1} parent=1 // loop_header_branch
      %19 = sbr.rel (%p17) target = $region8
    $region5: #{tpu_custom_call.1} parent=1 // loop_body
      %s21 = ssub.s32 %s16, 1
      %s22 = ssub.s32 %s16, 2
      %s23 = sadd.s32 %s16, 1
      %s24 = ssub.s32 %s16, %s23
      %p25 = scmp.eq.s32.totalorder %s24, 0
      %s27 = sadd.s32 %s26, 1
      %s28 = scalar_select %p25, %s26, %s27
      %p31 = pneg %p25
      %p32 = scmp.eq.s32.totalorder %s16, 1
      %p33 = por %p31, %p32
      %p34 = scmp.ne.s32.totalorder %s26, %s29
      %p35 = scmp.eq.s32.totalorder %s16, 0
      %p36 = por %p34, %p35
      %p37 = scmp.ne.s32.totalorder %s26, %s29
      %p38 = scmp.eq.s32.totalorder %s21, 1
      %p39 = por %p37, %p38
      %p40 = scmp.ne.s32.totalorder %s29, %s30
      %p41 = scmp.eq.s32.totalorder %s21, 0
      %p42 = por %p40, %p41
      %p43 = scmp.ne.s32.totalorder %s29, %s30
      %p44 = scmp.eq.s32.totalorder %s22, 1
      %p45 = por %p43, %p44
      %p47 = scmp.ne.s32.totalorder %s30, %s46
      %p48 = scmp.eq.s32.totalorder %s22, 0
      %p49 = por %p47, %p48
      %s51 = sadd.s32 %s50, 1
      %p54 = scmp.eq.s32.totalorder %s16, 1
      %p55 = scmp.ne.s32.totalorder %s50, %s52
      %p56 = scmp.eq.s32.totalorder %s16, 0
      %p57 = por %p55, %p56
      %p58 = scmp.ne.s32.totalorder %s50, %s52
      %p59 = scmp.eq.s32.totalorder %s21, 1
      %p60 = por %p58, %p59
      %p61 = scmp.ne.s32.totalorder %s52, %s53
      %p62 = scmp.eq.s32.totalorder %s21, 0
      %p63 = por %p61, %p62
      %p64 = scmp.ne.s32.totalorder %s52, %s53
      %p65 = scmp.eq.s32.totalorder %s22, 1
      %p66 = por %p64, %p65
      %p68 = scmp.ne.s32.totalorder %s53, %s67
      %p69 = scmp.eq.s32.totalorder %s22, 0
      %p70 = por %p68, %p69
      %s72 = sadd.s32 %s71, 1
      %p75 = scmp.eq.s32.totalorder %s16, 1
      %p76 = scmp.ne.s32.totalorder %s71, %s73
      %p77 = scmp.eq.s32.totalorder %s16, 0
      %p78 = por %p76, %p77
      %p79 = scmp.ne.s32.totalorder %s71, %s73
      %p80 = scmp.eq.s32.totalorder %s21, 1
      %p81 = por %p79, %p80
      %p82 = scmp.ne.s32.totalorder %s73, %s74
      %p83 = scmp.eq.s32.totalorder %s21, 0
      %p84 = por %p82, %p83
      %p85 = scmp.ne.s32.totalorder %s73, %s74
      %p86 = scmp.eq.s32.totalorder %s22, 1
      %p87 = por %p85, %p86
      %p89 = scmp.ne.s32.totalorder %s74, %s88
      %p90 = scmp.eq.s32.totalorder %s22, 0
      %p91 = por %p89, %p90
      %s92 = ssub.s32 %s16, %s23
      %p93 = scmp.eq.s32.totalorder %s92, 0
      %s95 = sadd.s32 %s94, 1
      %s96 = scalar_select %p93, %s94, %s95
      %p99 = pneg %p93
      %p100 = scmp.eq.s32.totalorder %s16, 1
      %p101 = por %p99, %p100
      %p102 = scmp.ne.s32.totalorder %s94, %s97
      %p103 = scmp.eq.s32.totalorder %s16, 0
      %p104 = por %p102, %p103
      %p105 = scmp.ne.s32.totalorder %s94, %s97
      %p106 = scmp.eq.s32.totalorder %s21, 1
      %p107 = por %p105, %p106
      %p108 = scmp.ne.s32.totalorder %s97, %s98
      %p109 = scmp.eq.s32.totalorder %s21, 0
      %p110 = por %p108, %p109
      %p111 = scmp.ne.s32.totalorder %s97, %s98
      %p112 = scmp.eq.s32.totalorder %s22, 1
      %p113 = por %p111, %p112
      %p115 = scmp.ne.s32.totalorder %s98, %s114
      %p116 = scmp.eq.s32.totalorder %s22, 0
      %p117 = por %p115, %p116
      %p118 = scmp.le.s32.totalorder 1, %s16
      %p119 = scmp.lt.s32.totalorder %s16, 3
      %p120 = pnand %p118, %p119
      %p121 = pneg %p120
      // Predicated region
      $region9: #{tpu_custom_call.1} parent=5 // pred_check
        _
      $region10: #{tpu_custom_call.1} parent=5 // pred_check_branch
        %123 = sbr.rel (%p120) target = $region12
      $region11: #{tpu_custom_call.1} parent=5 // pred_region
        %s124 = ssub.s32 %s16, 1
        // Predicated region
        $region13: #{tpu_custom_call.1} parent=11 // pred_check
          %p125 = pneg %p63
        $region14: #{tpu_custom_call.1} parent=11 // pred_check_branch
          %127 = sbr.rel (%p125) target = $region16
        $region15: #{tpu_custom_call.1} parent=11 // pred_region
          %s129 = ssub.s32 4096, 4096
          %130 = vsyncadd [#allocation6], %s129
          %s131 = sshll.u32 [#allocation5], 4
          %s132 = int_to_ptr.vmem [resolvable:$true] %s131
          %137 = dma.hbm_to_vmem [thread:$0]  %s1, 4096, %s132, [#allocation6], 128, 128, 8
        $region16: #{tpu_custom_call.1} parent=11 // pred_fallthru
          _
        // Predicated region
        $region17: #{tpu_custom_call.1} parent=11 // pred_check
          %p138 = pneg %p84
        $region18: #{tpu_custom_call.1} parent=11 // pred_check_branch
          %140 = sbr.rel (%p138) target = $region20
        $region19: #{tpu_custom_call.1} parent=11 // pred_region
          _
        $region20: #{tpu_custom_call.1} parent=11 // pred_fallthru
          _
      $region12: #{tpu_custom_call.1} parent=5 // pred_fallthru
        _
      %p141 = scmp.lt.s32.totalorder %s16, 2
      // Predicated region
      $region21: #{tpu_custom_call.1} parent=5 // pred_check
        %p142 = pneg %p141
      $region22: #{tpu_custom_call.1} parent=5 // pred_check_branch
        %144 = sbr.rel (%p142) target = $region24
      $region23: #{tpu_custom_call.1} parent=5 // pred_region
        // Predicated region
        $region25: #{tpu_custom_call.1} parent=23 // pred_check
          %p145 = pneg %p36
        $region26: #{tpu_custom_call.1} parent=23 // pred_check_branch
          %147 = sbr.rel (%p145) target = $region28
        $region27: #{tpu_custom_call.1} parent=23 // pred_region
          %s148 = sand.u32 %s26, 1
          %s149 = scalar_lea.sflag [#allocation3], %s148
          %s150 = sand.u32 %s26, 1
          %s151 = smul.addr %s150, 128
          %s152 = scalar_lea.vmem [#allocation2], %s151
          %s153 = smul.u32 16, %s16
          %s155 = ssub.s32 2048, 2048
          %156 = vsyncadd %s149, %s155
          %s157 = smul.addr %s153, 128
          %s158 = scalar_lea.hbm %s0, %s157
          %s159 = sshll.u32 %s152, 4
          %s160 = int_to_ptr.vmem [resolvable:$true] %s159
          %165 = dma.hbm_to_vmem [thread:$0]  %s158, 2048, %s160, %s149, 128, 128, 8
        $region28: #{tpu_custom_call.1} parent=23 // pred_fallthru
          _
      $region24: #{tpu_custom_call.1} parent=5 // pred_fallthru
        _
      %p166 = scmp.le.s32.totalorder 1, %s16
      %p167 = scmp.lt.s32.totalorder %s16, 3
      %p168 = pnand %p166, %p167
      %p169 = pneg %p168
      // Predicated region
      $region29: #{tpu_custom_call.1} parent=5 // pred_check
        _
      $region30: #{tpu_custom_call.1} parent=5 // pred_check_branch
        %171 = sbr.rel (%p168) target = $region32
      $region31: #{tpu_custom_call.1} parent=5 // pred_region
        %s172 = ssub.s32 %s16, 1
        %s173 = sand.u32 %s29, 1
        %s174 = scalar_lea.sflag [#allocation3], %s173
        %s175 = sand.u32 %s29, 1
        %s176 = smul.addr %s175, 128
        %s177 = scalar_lea.vmem [#allocation2], %s176
        // Predicated region
        $region33: #{tpu_custom_call.1} parent=31 // pred_check
          %p178 = pneg %p42
        $region34: #{tpu_custom_call.1} parent=31 // pred_check_branch
          %180 = sbr.rel (%p178) target = $region36
        $region35: #{tpu_custom_call.1} parent=31 // pred_region
          %181 = dma.done %s174, 2048
        $region36: #{tpu_custom_call.1} parent=31 // pred_fallthru
          _
        // Predicated region
        $region37: #{tpu_custom_call.1} parent=31 // pred_check
          %p182 = pneg %p63
        $region38: #{tpu_custom_call.1} parent=31 // pred_check_branch
          %184 = sbr.rel (%p182) target = $region40
        $region39: #{tpu_custom_call.1} parent=31 // pred_region
          %185 = dma.done [#allocation6], 4096
        $region40: #{tpu_custom_call.1} parent=31 // pred_fallthru
          _
        %s186 = sand.u32 %s29, 1
        %s187 = scalar_lea.sflag [#allocation3], %s186
        %s188 = sand.u32 %s29, 1
        %s189 = smul.addr %s188, 128
        %s190 = scalar_lea.vmem [#allocation2], %s189
        %p191 = pneg %p42
        %p192 = pneg %p39
        %p193 = pneg %p63
        %p194 = pneg %p60
        %p195 = pneg %p84
        %p196 = pneg %p81
        %p197 = pneg %p110
        %p198 = pneg %p107
        %s199 = sand.u32 %s97, 1
        %s200 = scalar_lea.sflag [#allocation4], %s199
        %s201 = sand.u32 %s97, 1
        %s202 = smul.addr %s201, 128
        %s203 = scalar_lea.vmem [#allocation7], %s202
        %s204 = smul.u32 16, %s21
        %s205 = smul.u32 16, %s21
        %v206 = vld [vmem:[%s177] sm:$0xff]
        %v207 = vld [vmem:[%s177 + $0x8] sm:$0xff]
        %v208 = vld [vmem:[%s177 + $0x10] sm:$0xff]
        %v209 = vld [vmem:[%s177 + $0x18] sm:$0xff]
        %v210 = vld [vmem:[%s177 + $0x20] sm:$0xff]
        %v211 = vld [vmem:[%s177 + $0x28] sm:$0xff]
        %v212 = vld [vmem:[%s177 + $0x30] sm:$0xff]
        %v213 = vld [vmem:[%s177 + $0x38] sm:$0xff]
        %v214 = vld [vmem:[%s177 + $0x40] sm:$0xff]
        %v215 = vld [vmem:[%s177 + $0x48] sm:$0xff]
        %v216 = vld [vmem:[%s177 + $0x50] sm:$0xff]
        %v217 = vld [vmem:[%s177 + $0x58] sm:$0xff]
        %v218 = vld [vmem:[%s177 + $0x60] sm:$0xff]
        %v219 = vld [vmem:[%s177 + $0x68] sm:$0xff]
        %v220 = vld [vmem:[%s177 + $0x70] sm:$0xff]
        %v221 = vld [vmem:[%s177 + $0x78] sm:$0xff]
        %v222 = vld [vmem:[#allocation5] sm:$0xff]
        %v223 = vld [vmem:[#allocation5 + $0x8] sm:$0xff]
        %v224 = vld [vmem:[#allocation5 + $0x10] sm:$0xff]
        %v225 = vld [vmem:[#allocation5 + $0x18] sm:$0xff]
        %v226 = vld [vmem:[#allocation5 + $0x20] sm:$0xff]
        %v227 = vld [vmem:[#allocation5 + $0x28] sm:$0xff]
        %v228 = vld [vmem:[#allocation5 + $0x30] sm:$0xff]
        %v229 = vld [vmem:[#allocation5 + $0x38] sm:$0xff]
        %v230 = vld [vmem:[#allocation5 + $0x40] sm:$0xff]
        %v231 = vld [vmem:[#allocation5 + $0x48] sm:$0xff]
        %v232 = vld [vmem:[#allocation5 + $0x50] sm:$0xff]
        %v233 = vld [vmem:[#allocation5 + $0x58] sm:$0xff]
        %v234 = vld [vmem:[#allocation5 + $0x60] sm:$0xff]
        %v235 = vld [vmem:[#allocation5 + $0x68] sm:$0xff]
        %v236 = vld [vmem:[#allocation5 + $0x70] sm:$0xff]
        %v237 = vld [vmem:[#allocation5 + $0x78] sm:$0xff]
        %v238 = vld [vmem:[%s2] sm:$0x1]
        %v239 = vlaneseq
        %v240 = vshrl.u32 %v239, 7
        %v241 = vsub.s32 0, %v240
        %v242 = vrot.slane %v238, %v241
        %243 = vmatprep.subr.mxu0 0.0
        %244 = vmatpush1.msra.mxu0 %v222
        %245 = vmatprep.subr.mxu0 0.0
        %246 = vmatpush1.msra.mxu0 %v223
        %247 = vmatprep.subr.mxu0 0.0
        %248 = vmatpush1.msra.mxu0 %v224
        %249 = vmatprep.subr.mxu0 0.0
        %250 = vmatpush1.msra.mxu0 %v225
        %251 = vmatprep.subr.mxu0 0.0
        %252 = vmatpush1.msra.mxu0 %v226
        %253 = vmatprep.subr.mxu0 0.0
        %254 = vmatpush1.msra.mxu0 %v227
        %255 = vmatprep.subr.mxu0 0.0
        %256 = vmatpush1.msra.mxu0 %v228
        %257 = vmatprep.subr.mxu0 0.0
        %258 = vmatpush1.msra.mxu0 %v229
        %259 = vmatprep.subr.mxu0 0.0
        %260 = vmatpush1.msra.mxu0 %v230
        %261 = vmatprep.subr.mxu0 0.0
        %262 = vmatpush1.msra.mxu0 %v231
        %263 = vmatprep.subr.mxu0 0.0
        %264 = vmatpush1.msra.mxu0 %v232
        %265 = vmatprep.subr.mxu0 0.0
        %266 = vmatpush1.msra.mxu0 %v233
        %267 = vmatprep.subr.mxu0 0.0
        %268 = vmatpush1.msra.mxu0 %v234
        %269 = vmatprep.subr.mxu0 0.0
        %270 = vmatpush1.msra.mxu0 %v235
        %271 = vmatprep.subr.mxu0 0.0
        %272 = vmatpush1.msra.mxu0 %v236
        %273 = vmatprep.subr.mxu0 0.0
        %274 = vmatpush1.msra.mxu0 %v237
        %275 = vmatprep.subr.mxu0 0.0
        %276 = vmatpush1.msra.mxu0 0.0
        %277 = vmatprep.subr.mxu0 0.0
        %278 = vmatpush1.msra.mxu0 0.0
        %279 = vmatprep.subr.mxu0 0.0
        %280 = vmatpush1.msra.mxu0 0.0
        %281 = vmatprep.subr.mxu0 0.0
        %282 = vmatpush1.msra.mxu0 0.0
        %283 = vmatprep.subr.mxu0 0.0
        %284 = vmatpush1.msra.mxu0 0.0
        %285 = vmatprep.subr.mxu0 0.0
        %286 = vmatpush1.msra.mxu0 0.0
        %287 = vmatprep.subr.mxu0 0.0
        %288 = vmatpush1.msra.mxu0 0.0
        %289 = vmatprep.subr.mxu0 0.0
        %290 = vmatpush1.msra.mxu0 0.0
        %291 = vmatprep.subr.mxu0 0.0
        %292 = vmatpush1.msra.mxu0 0.0
        %293 = vmatprep.subr.mxu0 0.0
        %294 = vmatpush1.msra.mxu0 0.0
        %295 = vmatprep.subr.mxu0 0.0
        %296 = vmatpush1.msra.mxu0 0.0
        %297 = vmatprep.subr.mxu0 0.0
        %298 = vmatpush1.msra.mxu0 0.0
        %299 = vmatprep.subr.mxu0 0.0
        %300 = vmatpush1.msra.mxu0 0.0
        %301 = vmatprep.subr.mxu0 0.0
        %302 = vmatpush1.msra.mxu0 0.0
        %303 = vmatprep.subr.mxu0 0.0
        %304 = vmatpush1.msra.mxu0 0.0
        %305 = vmatprep.subr.mxu0 0.0
        %306 = vmatpush1.msra.mxu0 0.0
        %307 = vmatprep.mubr.f32.mxu0 0.0
        %308 = vmatmul.mubr.f32.gmra.mrb[0].mxu0 %v206
        %v309 = vpop.f32.mrb[0].mxu0
        %v310 = vadd.f32 %v242, %v309
        %v311 = vpop.f32.mrb[0].mxu0
        %312 = vmatprep.mubr.f32.mxu0 0.0
        %313 = vmatmul.mubr.f32.gmra.mrb[0].mxu0 %v207
        %v314 = vpop.f32.mrb[0].mxu0
        %v315 = vadd.f32 %v242, %v314
        %v316 = vpop.f32.mrb[0].mxu0
        %317 = vmatprep.mubr.f32.mxu0 0.0
        %318 = vmatmul.mubr.f32.gmra.mrb[0].mxu0 %v208
        %v319 = vpop.f32.mrb[0].mxu0
        %v320 = vadd.f32 %v242, %v319
        %v321 = vpop.f32.mrb[0].mxu0
        %322 = vmatprep.mubr.f32.mxu0 0.0
        %323 = vmatmul.mubr.f32.gmra.mrb[0].mxu0 %v209
        %v324 = vpop.f32.mrb[0].mxu0
        %v325 = vadd.f32 %v242, %v324
        %v326 = vpop.f32.mrb[0].mxu0
        %327 = vmatprep.mubr.f32.mxu0 0.0
        %328 = vmatmul.mubr.f32.gmra.mrb[0].mxu0 %v210
        %v329 = vpop.f32.mrb[0].mxu0
        %v330 = vadd.f32 %v242, %v329
        %v331 = vpop.f32.mrb[0].mxu0
        %332 = vmatprep.mubr.f32.mxu0 0.0
        %333 = vmatmul.mubr.f32.gmra.mrb[0].mxu0 %v211
        %v334 = vpop.f32.mrb[0].mxu0
        %v335 = vadd.f32 %v242, %v334
        %v336 = vpop.f32.mrb[0].mxu0
        %337 = vmatprep.mubr.f32.mxu0 0.0
        %338 = vmatmul.mubr.f32.gmra.mrb[0].mxu0 %v212
        %v339 = vpop.f32.mrb[0].mxu0
        %v340 = vadd.f32 %v242, %v339
        %v341 = vpop.f32.mrb[0].mxu0
        %342 = vmatprep.mubr.f32.mxu0 0.0
        %343 = vmatmul.mubr.f32.gmra.mrb[0].mxu0 %v213
        %v344 = vpop.f32.mrb[0].mxu0
        %v345 = vadd.f32 %v242, %v344
        %v346 = vpop.f32.mrb[0].mxu0
        %347 = vmatprep.mubr.f32.mxu0 0.0
        %348 = vmatmul.mubr.f32.gmra.mrb[0].mxu0 %v214
        %v349 = vpop.f32.mrb[0].mxu0
        %v350 = vadd.f32 %v242, %v349
        %v351 = vpop.f32.mrb[0].mxu0
        %352 = vmatprep.mubr.f32.mxu0 0.0
        %353 = vmatmul.mubr.f32.gmra.mrb[0].mxu0 %v215
        %v354 = vpop.f32.mrb[0].mxu0
        %v355 = vadd.f32 %v242, %v354
        %v356 = vpop.f32.mrb[0].mxu0
        %357 = vmatprep.mubr.f32.mxu0 0.0
        %358 = vmatmul.mubr.f32.gmra.mrb[0].mxu0 %v216
        %v359 = vpop.f32.mrb[0].mxu0
        %v360 = vadd.f32 %v242, %v359
        %v361 = vpop.f32.mrb[0].mxu0
        %362 = vmatprep.mubr.f32.mxu0 0.0
        %363 = vmatmul.mubr.f32.gmra.mrb[0].mxu0 %v217
        %v364 = vpop.f32.mrb[0].mxu0
        %v365 = vadd.f32 %v242, %v364
        %v366 = vpop.f32.mrb[0].mxu0
        %367 = vmatprep.mubr.f32.mxu0 0.0
        %368 = vmatmul.mubr.f32.gmra.mrb[0].mxu0 %v218
        %v369 = vpop.f32.mrb[0].mxu0
        %v370 = vadd.f32 %v242, %v369
        %v371 = vpop.f32.mrb[0].mxu0
        %372 = vmatprep.mubr.f32.mxu0 0.0
        %373 = vmatmul.mubr.f32.gmra.mrb[0].mxu0 %v219
        %v374 = vpop.f32.mrb[0].mxu0
        %v375 = vadd.f32 %v242, %v374
        %v376 = vpop.f32.mrb[0].mxu0
        %377 = vmatprep.mubr.f32.mxu0 0.0
        %378 = vmatmul.mubr.f32.gmra.mrb[0].mxu0 %v220
        %v379 = vpop.f32.mrb[0].mxu0
        %v380 = vadd.f32 %v242, %v379
        %v381 = vpop.f32.mrb[0].mxu0
        %382 = vmatprep.mubr.f32.mxu0 0.0
        %383 = vmatmul.mubr.f32.gmra.mrb[0].mxu0 %v221
        %v384 = vpop.f32.mrb[0].mxu0
        %v385 = vadd.f32 %v242, %v384
        %v386 = vpop.f32.mrb[0].mxu0
        %387 = vdwg.mxu0
        %v388 = vmax.f32 %v310, 0.0
        %v389 = vmax.f32 %v315, 0.0
        %v390 = vmax.f32 %v320, 0.0
        %v391 = vmax.f32 %v325, 0.0
        %v392 = vmax.f32 %v330, 0.0
        %v393 = vmax.f32 %v335, 0.0
        %v394 = vmax.f32 %v340, 0.0
        %v395 = vmax.f32 %v345, 0.0
        %v396 = vmax.f32 %v350, 0.0
        %v397 = vmax.f32 %v355, 0.0
        %v398 = vmax.f32 %v360, 0.0
        %v399 = vmax.f32 %v365, 0.0
        %v400 = vmax.f32 %v370, 0.0
        %v401 = vmax.f32 %v375, 0.0
        %v402 = vmax.f32 %v380, 0.0
        %v403 = vmax.f32 %v385, 0.0
        %s404 = scalar_lea.vmem [#allocation5], 128
        %v405 = vld [vmem:[%s404] sm:$0xff]
        %v406 = vld [vmem:[%s404 + $0x8] sm:$0xff]
        %v407 = vld [vmem:[%s404 + $0x10] sm:$0xff]
        %v408 = vld [vmem:[%s404 + $0x18] sm:$0xff]
        %v409 = vld [vmem:[%s404 + $0x20] sm:$0xff]
        %v410 = vld [vmem:[%s404 + $0x28] sm:$0xff]
        %v411 = vld [vmem:[%s404 + $0x30] sm:$0xff]
        %v412 = vld [vmem:[%s404 + $0x38] sm:$0xff]
        %v413 = vld [vmem:[%s404 + $0x40] sm:$0xff]
        %v414 = vld [vmem:[%s404 + $0x48] sm:$0xff]
        %v415 = vld [vmem:[%s404 + $0x50] sm:$0xff]
        %v416 = vld [vmem:[%s404 + $0x58] sm:$0xff]
        %v417 = vld [vmem:[%s404 + $0x60] sm:$0xff]
        %v418 = vld [vmem:[%s404 + $0x68] sm:$0xff]
        %v419 = vld [vmem:[%s404 + $0x70] sm:$0xff]
        %v420 = vld [vmem:[%s404 + $0x78] sm:$0xff]
        %v421 = vld [vmem:[%s2 + $0x1] sm:$0x1]
        %v422 = vlaneseq
        %v423 = vshrl.u32 %v422, 7
        %v424 = vsub.s32 0, %v423
        %v425 = vrot.slane %v421, %v424
        %426 = vmatprep.subr.mxu0 0.0
        %427 = vmatpush1.msra.mxu0 %v405
        %428 = vmatprep.subr.mxu0 0.0
        %429 = vmatpush1.msra.mxu0 %v406
        %430 = vmatprep.subr.mxu0 0.0
        %431 = vmatpush1.msra.mxu0 %v407
        %432 = vmatprep.subr.mxu0 0.0
        %433 = vmatpush1.msra.mxu0 %v408
        %434 = vmatprep.subr.mxu0 0.0
        %435 = vmatpush1.msra.mxu0 %v409
        %436 = vmatprep.subr.mxu0 0.0
        %437 = vmatpush1.msra.mxu0 %v410
        %438 = vmatprep.subr.mxu0 0.0
        %439 = vmatpush1.msra.mxu0 %v411
        %440 = vmatprep.subr.mxu0 0.0
        %441 = vmatpush1.msra.mxu0 %v412
        %442 = vmatprep.subr.mxu0 0.0
        %443 = vmatpush1.msra.mxu0 %v413
        %444 = vmatprep.subr.mxu0 0.0
        %445 = vmatpush1.msra.mxu0 %v414
        %446 = vmatprep.subr.mxu0 0.0
        %447 = vmatpush1.msra.mxu0 %v415
        %448 = vmatprep.subr.mxu0 0.0
        %449 = vmatpush1.msra.mxu0 %v416
        %450 = vmatprep.subr.mxu0 0.0
        %451 = vmatpush1.msra.mxu0 %v417
        %452 = vmatprep.subr.mxu0 0.0
        %453 = vmatpush1.msra.mxu0 %v418
        %454 = vmatprep.subr.mxu0 0.0
        %455 = vmatpush1.msra.mxu0 %v419
        %456 = vmatprep.subr.mxu0 0.0
        %457 = vmatpush1.msra.mxu0 %v420
        %458 = vmatprep.subr.mxu0 0.0
        %459 = vmatpush1.msra.mxu0 0.0
        %460 = vmatprep.subr.mxu0 0.0
        %461 = vmatpush1.msra.mxu0 0.0
        %462 = vmatprep.subr.mxu0 0.0
        %463 = vmatpush1.msra.mxu0 0.0
        %464 = vmatprep.subr.mxu0 0.0
        %465 = vmatpush1.msra.mxu0 0.0
        %466 = vmatprep.subr.mxu0 0.0
        %467 = vmatpush1.msra.mxu0 0.0
        %468 = vmatprep.subr.mxu0 0.0
        %469 = vmatpush1.msra.mxu0 0.0
        %470 = vmatprep.subr.mxu0 0.0
        %471 = vmatpush1.msra.mxu0 0.0
        %472 = vmatprep.subr.mxu0 0.0
        %473 = vmatpush1.msra.mxu0 0.0
        %474 = vmatprep.subr.mxu0 0.0
        %475 = vmatpush1.msra.mxu0 0.0
        %476 = vmatprep.subr.mxu0 0.0
        %477 = vmatpush1.msra.mxu0 0.0
        %478 = vmatprep.subr.mxu0 0.0
        %479 = vmatpush1.msra.mxu0 0.0
        %480 = vmatprep.subr.mxu0 0.0
        %481 = vmatpush1.msra.mxu0 0.0
        %482 = vmatprep.subr.mxu0 0.0
        %483 = vmatpush1.msra.mxu0 0.0
        %484 = vmatprep.subr.mxu0 0.0
        %485 = vmatpush1.msra.mxu0 0.0
        %486 = vmatprep.subr.mxu0 0.0
        %487 = vmatpush1.msra.mxu0 0.0
        %488 = vmatprep.subr.mxu0 0.0
        %489 = vmatpush1.msra.mxu0 0.0
        %490 = vmatprep.mubr.f32.mxu0 0.0
        %491 = vmatmul.mubr.f32.gmra.mrb[0].mxu0 %v388
        %v492 = vpop.f32.mrb[0].mxu0
        %v493 = vadd.f32 %v425, %v492
        %v494 = vpop.f32.mrb[0].mxu0
        %495 = vmatprep.mubr.f32.mxu0 0.0
        %496 = vmatmul.mubr.f32.gmra.mrb[0].mxu0 %v389
        %v497 = vpop.f32.mrb[0].mxu0
        %v498 = vadd.f32 %v425, %v497
        %v499 = vpop.f32.mrb[0].mxu0
        %500 = vmatprep.mubr.f32.mxu0 0.0
        %501 = vmatmul.mubr.f32.gmra.mrb[0].mxu0 %v390
        %v502 = vpop.f32.mrb[0].mxu0
        %v503 = vadd.f32 %v425, %v502
        %v504 = vpop.f32.mrb[0].mxu0
        %505 = vmatprep.mubr.f32.mxu0 0.0
        %506 = vmatmul.mubr.f32.gmra.mrb[0].mxu0 %v391
        %v507 = vpop.f32.mrb[0].mxu0
        %v508 = vadd.f32 %v425, %v507
        %v509 = vpop.f32.mrb[0].mxu0
        %510 = vmatprep.mubr.f32.mxu0 0.0
        %511 = vmatmul.mubr.f32.gmra.mrb[0].mxu0 %v392
        %v512 = vpop.f32.mrb[0].mxu0
        %v513 = vadd.f32 %v425, %v512
        %v514 = vpop.f32.mrb[0].mxu0
        %515 = vmatprep.mubr.f32.mxu0 0.0
        %516 = vmatmul.mubr.f32.gmra.mrb[0].mxu0 %v393
        %v517 = vpop.f32.mrb[0].mxu0
        %v518 = vadd.f32 %v425, %v517
        %v519 = vpop.f32.mrb[0].mxu0
        %520 = vmatprep.mubr.f32.mxu0 0.0
        %521 = vmatmul.mubr.f32.gmra.mrb[0].mxu0 %v394
        %v522 = vpop.f32.mrb[0].mxu0
        %v523 = vadd.f32 %v425, %v522
        %v524 = vpop.f32.mrb[0].mxu0
        %525 = vmatprep.mubr.f32.mxu0 0.0
        %526 = vmatmul.mubr.f32.gmra.mrb[0].mxu0 %v395
        %v527 = vpop.f32.mrb[0].mxu0
        %v528 = vadd.f32 %v425, %v527
        %v529 = vpop.f32.mrb[0].mxu0
        %530 = vmatprep.mubr.f32.mxu0 0.0
        %531 = vmatmul.mubr.f32.gmra.mrb[0].mxu0 %v396
        %v532 = vpop.f32.mrb[0].mxu0
        %v533 = vadd.f32 %v425, %v532
        %v534 = vpop.f32.mrb[0].mxu0
        %535 = vmatprep.mubr.f32.mxu0 0.0
        %536 = vmatmul.mubr.f32.gmra.mrb[0].mxu0 %v397
        %v537 = vpop.f32.mrb[0].mxu0
        %v538 = vadd.f32 %v425, %v537
        %v539 = vpop.f32.mrb[0].mxu0
        %540 = vmatprep.mubr.f32.mxu0 0.0
        %541 = vmatmul.mubr.f32.gmra.mrb[0].mxu0 %v398
        %v542 = vpop.f32.mrb[0].mxu0
        %v543 = vadd.f32 %v425, %v542
        %v544 = vpop.f32.mrb[0].mxu0
        %545 = vmatprep.mubr.f32.mxu0 0.0
        %546 = vmatmul.mubr.f32.gmra.mrb[0].mxu0 %v399
        %v547 = vpop.f32.mrb[0].mxu0
        %v548 = vadd.f32 %v425, %v547
        %v549 = vpop.f32.mrb[0].mxu0
        %550 = vmatprep.mubr.f32.mxu0 0.0
        %551 = vmatmul.mubr.f32.gmra.mrb[0].mxu0 %v400
        %v552 = vpop.f32.mrb[0].mxu0
        %v553 = vadd.f32 %v425, %v552
        %v554 = vpop.f32.mrb[0].mxu0
        %555 = vmatprep.mubr.f32.mxu0 0.0
        %556 = vmatmul.mubr.f32.gmra.mrb[0].mxu0 %v401
        %v557 = vpop.f32.mrb[0].mxu0
        %v558 = vadd.f32 %v425, %v557
        %v559 = vpop.f32.mrb[0].mxu0
        %560 = vmatprep.mubr.f32.mxu0 0.0
        %561 = vmatmul.mubr.f32.gmra.mrb[0].mxu0 %v402
        %v562 = vpop.f32.mrb[0].mxu0
        %v563 = vadd.f32 %v425, %v562
        %v564 = vpop.f32.mrb[0].mxu0
        %565 = vmatprep.mubr.f32.mxu0 0.0
        %566 = vmatmul.mubr.f32.gmra.mrb[0].mxu0 %v403
        %v567 = vpop.f32.mrb[0].mxu0
        %v568 = vadd.f32 %v425, %v567
        %v569 = vpop.f32.mrb[0].mxu0
        %570 = vdwg.mxu0
        %v571 = vmax.f32 %v493, 0.0
        %v572 = vmax.f32 %v498, 0.0
        %v573 = vmax.f32 %v503, 0.0
        %v574 = vmax.f32 %v508, 0.0
        %v575 = vmax.f32 %v513, 0.0
        %v576 = vmax.f32 %v518, 0.0
        %v577 = vmax.f32 %v523, 0.0
        %v578 = vmax.f32 %v528, 0.0
        %v579 = vmax.f32 %v533, 0.0
        %v580 = vmax.f32 %v538, 0.0
        %v581 = vmax.f32 %v543, 0.0
        %v582 = vmax.f32 %v548, 0.0
        %v583 = vmax.f32 %v553, 0.0
        %v584 = vmax.f32 %v558, 0.0
        %v585 = vmax.f32 %v563, 0.0
        %v586 = vmax.f32 %v568, 0.0
        %587 = vst [vmem:[%s203] sm:$0xff] %v571
        %588 = vst [vmem:[%s203 + $0x8] sm:$0xff] %v572
        %589 = vst [vmem:[%s203 + $0x10] sm:$0xff] %v573
        %590 = vst [vmem:[%s203 + $0x18] sm:$0xff] %v574
        %591 = vst [vmem:[%s203 + $0x20] sm:$0xff] %v575
        %592 = vst [vmem:[%s203 + $0x28] sm:$0xff] %v576
        %593 = vst [vmem:[%s203 + $0x30] sm:$0xff] %v577
        %594 = vst [vmem:[%s203 + $0x38] sm:$0xff] %v578
        %595 = vst [vmem:[%s203 + $0x40] sm:$0xff] %v579
        %596 = vst [vmem:[%s203 + $0x48] sm:$0xff] %v580
        %597 = vst [vmem:[%s203 + $0x50] sm:$0xff] %v581
        %598 = vst [vmem:[%s203 + $0x58] sm:$0xff] %v582
        %599 = vst [vmem:[%s203 + $0x60] sm:$0xff] %v583
        %600 = vst [vmem:[%s203 + $0x68] sm:$0xff] %v584
        %601 = vst [vmem:[%s203 + $0x70] sm:$0xff] %v585
        %602 = vst [vmem:[%s203 + $0x78] sm:$0xff] %v586
        %s603 = sand.u32 %s97, 1
        %s604 = scalar_lea.sflag [#allocation4], %s603
        %s605 = sand.u32 %s97, 1
        %s606 = smul.addr %s605, 128
        %s607 = scalar_lea.vmem [#allocation7], %s606
        // Predicated region
        $region41: #{tpu_custom_call.1} parent=31 // pred_check
          %p608 = pneg %p107
        $region42: #{tpu_custom_call.1} parent=31 // pred_check_branch
          %610 = sbr.rel (%p608) target = $region44
        $region43: #{tpu_custom_call.1} parent=31 // pred_region
          %s611 = smul.u32 16, %s21
          %s613 = ssub.s32 2048, 2048
          %614 = vsyncadd %s604, %s613
          %s615 = smul.addr %s611, 128
          %s616 = scalar_lea.hbm %s3, %s615
          %s617 = sshll.u32 %s607, 4
          %s618 = int_to_ptr.vmem [resolvable:$true] %s617
          %623 = dma.vmem_to_hbm [thread:$0]  %s618, 2048, %s616, %s604, 128, 128, 8
        $region44: #{tpu_custom_call.1} parent=31 // pred_fallthru
          _
      $region32: #{tpu_custom_call.1} parent=5 // pred_fallthru
        _
      %p624 = scmp.le.s32.totalorder 2, %s16
      // Predicated region
      $region45: #{tpu_custom_call.1} parent=5 // pred_check
        %p625 = pneg %p624
      $region46: #{tpu_custom_call.1} parent=5 // pred_check_branch
        %627 = sbr.rel (%p625) target = $region48
      $region47: #{tpu_custom_call.1} parent=5 // pred_region
        %s628 = ssub.s32 %s16, 2
        // Predicated region
        $region49: #{tpu_custom_call.1} parent=47 // pred_check
          %p629 = pneg %p113
        $region50: #{tpu_custom_call.1} parent=47 // pred_check_branch
          %631 = sbr.rel (%p629) target = $region52
        $region51: #{tpu_custom_call.1} parent=47 // pred_region
          %s632 = sand.u32 %s98, 1
          %s633 = scalar_lea.sflag [#allocation4], %s632
          %s634 = sand.u32 %s98, 1
          %s635 = smul.addr %s634, 128
          %s636 = scalar_lea.vmem [#allocation7], %s635
          %637 = dma.done %s633, 2048
        $region52: #{tpu_custom_call.1} parent=47 // pred_fallthru
          _
      $region48: #{tpu_custom_call.1} parent=5 // pred_fallthru
        _
    $region6: #{tpu_custom_call.1} parent=1 // loop_footer
      %s20 = sadd.s32 1, %s16
    $region7: #{tpu_custom_call.1} parent=1 // loop_footer_branch
      %15 = sbr.rel target = $region3
    $region8: #{tpu_custom_call.1} parent=1 // loop_exit
      _
    %638 = vsyncpa [#allocation3], 1
    %s639 = scalar_lea.sflag [#allocation3], 1
    %640 = vsyncpa %s639, 1
    %641 = vsyncpa [#allocation6], 1
    %642 = vsyncpa [#allocation4], 1
    %s643 = scalar_lea.sflag [#allocation4], 1
    %644 = vsyncpa %s643, 1

</llo_original>
